<compile_context>
chip_gen: v5e
topology: v5e:2x2
jax: 0.10.0
libtpu: 0.0.40
codegen_flags: <defaults>
</compile_context>

<pallas_src>
import numpy as np
import jax
import jax.numpy as jnp
from jax import lax
from jax.experimental import pallas as pl
from jax.experimental.pallas import tpu as pltpu


_MAX_BB = 32  # max images per grid step


# ----------------------- host-side constant folding ---------------------------

def _col_select(w_out, w_in, stride, pad):
    """T[kw, w, wo] = 1  iff  w == stride*wo + kw - pad (in range)."""
    t = np.zeros((3, w_in, w_out), np.float32)
    for kw in range(3):
        for wo in range(w_out):
            w = stride * wo + kw - pad
            if 0 <= w < w_in:
                t[kw, w, wo] = 1.0
    return t


def _fold_conv_weights(w, w_in, w_out, stride, pad):
    """Fold the kw column gather + W-padding into the conv weight.

    w: [Cout, Cin, 3, 3] (torch layout).  Returns wk[kh] of shape
    [w_in*Cin, w_out*Cout] so that  act[rows, w*Cin+ci] @ wk[kh]  contracts over
    both the spatial-W and input-channel axes at once.
    """
    t = jnp.asarray(_col_select(w_out, w_in, stride, pad))            # [3, w_in, w_out]
    wk = jnp.einsum("kpw,oihk->hpiwo", t, w, precision=lax.Precision.HIGHEST)
    c_in, c_out = w.shape[1], w.shape[0]
    return wk.reshape(3, w_in * c_in, w_out * c_out)


def _pad_last2(a, rows, cols):
    pad = [(0, 0)] * (a.ndim - 2) + [(0, rows - a.shape[-2]), (0, cols - a.shape[-1])]
    return jnp.pad(a, pad)


# ------------------------------ fused kernel ----------------------------------

def _encoder_kernel(x_ref, wk1_ref, wbig_ref, w2_ref, bl2_ref, c_ref,
                    o_ref, s1_ref, s2_ref, s3_ref):
    """Whole encoder for one tile of bb images; activations stay VMEM resident.

    x_ref : [8 + bb*32, 28]   (8 zero guard rows, then per image 28 rows + 4 zero rows)
    s1    : [8 + bb*16, 128]  conv1 output (8 zero guard rows, 16 rows/image, 2 junk)
    s2    : [bb*8 + 8, 128]   conv2 output (8 rows/image, 1 junk) + zero bottom guard
    s3    : [bb*4, 128]       conv3 output (4 rows/image, 1 junk)
    """
    bb = o_ref.shape[0]
    r1, r2, r3 = bb * 16, bb * 8, bb * 4
    f32 = jnp.float32

    def mm(a, b):
        return jnp.dot(a, b, preferred_element_type=f32)

    # ---- Conv2d(1,8,3,s=2,p=1) + ReLU ----------------------------- [bb*16, 128]
    # input row for (image b, out-row ho, kh) sits at physical row 2*(b*16+ho)+kh+7.
    a = mm(x_ref[pl.ds(7, r1, 2), :], wk1_ref[0])
    a = a + mm(x_ref[pl.ds(8, r1, 2), :], wk1_ref[1])
    a = a + mm(x_ref[pl.ds(9, r1, 2), :], wk1_ref[2])
    a = jnp.maximum(a + c_ref[pl.ds(0, 1), :], 0.0)
    # Zero the 2 junk rows per image (padded H_out=16 vs true 14) so that conv2's
    # "h = -1" padding reads (which land on the previous image's row 15) are exact zeros.
    row = lax.broadcasted_iota(jnp.int32, (r1, 128), 0)
    a = jnp.where((row % 16) < 14, a, 0.0)
    s1_ref[pl.ds(0, 8), :] = jnp.zeros((8, 128), f32)          # top guard (h = -1 pad)
    s1_ref[pl.ds(8, r1), :] = a

    # ---- Conv2d(8,16,3,s=2,p=1) + BatchNorm2d(16) + ReLU ----------- [bb*8, 128]
    h = mm(s1_ref[pl.ds(7, r2, 2), :], wbig_ref[0])
    h = h + mm(s1_ref[pl.ds(8, r2, 2), :], wbig_ref[1])
    h = h + mm(s1_ref[pl.ds(9, r2, 2), :], wbig_ref[2])
    h = jnp.maximum(h * c_ref[pl.ds(1, 1), :] + c_ref[pl.ds(2, 1), :], 0.0)
    s2_ref[pl.ds(0, r2), :] = h
    s2_ref[pl.ds(r2, 8), :] = jnp.zeros((8, 128), f32)         # bottom guard (junk row only)

    # ---- Conv2d(16,32,3,s=2,p=0) + ReLU ----------------------------- [bb*4, 128]
    g = mm(s2_ref[pl.ds(0, r3, 2), :], wbig_ref[3])
    g = g + mm(s2_ref[pl.ds(1, r3, 2), :], wbig_ref[4])
    g = g + mm(s2_ref[pl.ds(2, r3, 2), :], wbig_ref[5])
    g = jnp.maximum(g + c_ref[pl.ds(3, 1), :], 0.0)
    s3_ref[...] = g

    # ---- Flatten + Linear(288,128) + ReLU ------------------------------ [bb, 128]
    # torch's (C,H,W) flatten order is folded into the repacked weight; the three
    # valid rows per image are gathered with stride-4 sublane loads.
    z = mm(s3_ref[pl.ds(0, bb, 4), :], wbig_ref[6])
    z = z + mm(s3_ref[pl.ds(1, bb, 4), :], wbig_ref[7])
    z = z + mm(s3_ref[pl.ds(2, bb, 4), :], wbig_ref[8])
    z = jnp.maximum(z + c_ref[pl.ds(4, 1), :], 0.0)

    # ---- Linear(128, encoded_space_dim), lane-padded to 128+ ---------- [bb, dpad]
    o_ref[...] = (mm(z, w2_ref[...]) + bl2_ref[...]).astype(o_ref.dtype)


# ------------------------------ forward wrapper --------------------------------

def encoder_forward(params, x):
    eps = 1e-5
    n = x.shape[0]
    d = params["lin2_w"].shape[0]
    dpad = 128 * ((d + 127) // 128)

    bb = int(min(_MAX_BB, -(-n // 8) * 8))          # batch tile, multiple of 8
    n_pad = -(-n // bb) * bb
    tiles = n_pad // bb

    # ---- fold conv / linear weights into matmul-ready, lane-padded tables ----
    wk1 = _pad_last2(_fold_conv_weights(params["conv1_w"], 28, 14, 2, 1), 28, 128)
    wk2 = _pad_last2(_fold_conv_weights(params["conv2_w"], 14, 7, 2, 1), 128, 128)
    wk3 = _pad_last2(_fold_conv_weights(params["conv3_w"], 7, 3, 2, 0), 128, 128)
    # Linear(288,128): activation column order is w*32 + c; torch input index is c*9+h*3+w.
    w1 = params["lin1_w"].reshape(128, 32, 3, 3)                       # [o, c, h, w]
    w1p = _pad_last2(jnp.transpose(w1, (2, 3, 1, 0)).reshape(3, 96, 128), 128, 128)
    wbig = jnp.concatenate([wk2, wk3, w1p], axis=0)                    # [9, 128, 128]
    w2p = _pad_last2(params["lin2_w"].T, 128, dpad)                    # [128, dpad]
    bl2 = _pad_last2(params["lin2_b"][None, :], 1, dpad)               # [1, dpad]

    bn_scale = params["bn_gamma"] / jnp.sqrt(params["bn_var"] + eps)
    bn_shift = params["bn_beta"] - params["bn_mean"] * bn_scale
    consts = jnp.zeros((8, 128), jnp.float32)
    consts = consts.at[0, :112].set(jnp.tile(params["conv1_b"], 14))
    consts = consts.at[1, :112].set(jnp.tile(bn_scale, 7))
    consts = consts.at[2, :112].set(jnp.tile(params["conv2_b"] * bn_scale + bn_shift, 7))
    consts = consts.at[3, :96].set(jnp.tile(params["conv3_b"], 3))
    consts = consts.at[4, :].set(params["lin1_b"])

    # ---- pack input: per tile = [8 zero guard rows] + bb * [28 image rows + 4 zero rows]
    xs = x.reshape(n, 28, 28).astype(jnp.float32)
    xs = jnp.pad(xs, ((0, n_pad - n), (0, 4), (0, 0)))                 # -> [n_pad, 32, 28]
    xs = xs.reshape(tiles, bb * 32, 28)
    xs = jnp.pad(xs, ((0, 0), (8, 0), (0, 0)))                         # 8 guard rows / tile
    xs = xs.reshape(tiles * (8 + bb * 32), 28)

    out = pl.pallas_call(
        _encoder_kernel,
        out_shape=jax.ShapeDtypeStruct((n_pad, dpad), jnp.float32),
        grid=(tiles,),
        in_specs=[
            pl.BlockSpec((8 + bb * 32, 28), lambda i: (i, 0)),         # stacked images
            pl.BlockSpec(wk1.shape, lambda i: (0, 0, 0)),
            pl.BlockSpec(wbig.shape, lambda i: (0, 0, 0)),
            pl.BlockSpec(w2p.shape, lambda i: (0, 0)),
            pl.BlockSpec(bl2.shape, lambda i: (0, 0)),
            pl.BlockSpec(consts.shape, lambda i: (0, 0)),
        ],
        out_specs=pl.BlockSpec((bb, dpad), lambda i: (i, 0)),
        scratch_shapes=[
            pltpu.VMEM((8 + bb * 16, 128), jnp.float32),               # conv1 activation
            pltpu.VMEM((bb * 8 + 8, 128), jnp.float32),                # conv2 activation
            pltpu.VMEM((bb * 4, 128), jnp.float32),                    # conv3 activation
        ],
        compiler_params=pltpu.CompilerParams(dimension_semantics=("parallel",)),
    )(xs, wk1, wbig, w2p, bl2, consts)

    return out[:n, :d]


# ------------------------------- parameters ------------------------------------

def init_params(key, encoded_space_dim):
    ks = jax.random.split(key, 10)

    def nrm(k, shape, s=0.1):
        return jax.random.normal(k, shape, jnp.float32) * s

    return {
        "conv1_w": nrm(ks[0], (8, 1, 3, 3)),   "conv1_b": nrm(ks[1], (8,)),
        "conv2_w": nrm(ks[2], (16, 8, 3, 3)),  "conv2_b": nrm(ks[3], (16,)),
        "bn_gamma": jnp.ones((16,), jnp.float32),
        "bn_beta": jnp.zeros((16,), jnp.float32),
        "bn_mean": jnp.zeros((16,), jnp.float32),
        "bn_var": jnp.ones((16,), jnp.float32),
        "conv3_w": nrm(ks[4], (32, 16, 3, 3)), "conv3_b": nrm(ks[5], (32,)),
        "lin1_w": nrm(ks[6], (128, 3 * 3 * 32)), "lin1_b": nrm(ks[7], (128,)),
        "lin2_w": nrm(ks[8], (encoded_space_dim, 128)),
        "lin2_b": nrm(ks[9], (encoded_space_dim,)),
    }


# --------------------------- pure-JAX reference --------------------------------

def encoder_reference(params, x):
    eps = 1e-5
    hp = lax.Precision.HIGHEST

    def conv(x, w, b, stride, pad):
        y = lax.conv_general_dilated(
            x, w, (stride, stride), [(pad, pad), (pad, pad)],
            dimension_numbers=("NCHW", "OIHW", "NCHW"), precision=hp)
        return y + b.reshape(1, -1, 1, 1)

    h = jax.nn.relu(conv(x, params["conv1_w"], params["conv1_b"], 2, 1))
    h = conv(h, params["conv2_w"], params["conv2_b"], 2, 1)
    s = params["bn_gamma"] / jnp.sqrt(params["bn_var"] + eps)
    t = params["bn_beta"] - params["bn_mean"] * s
    h = jax.nn.relu(h * s.reshape(1, -1, 1, 1) + t.reshape(1, -1, 1, 1))
    h = jax.nn.relu(conv(h, params["conv3_w"], params["conv3_b"], 2, 0))
    h = h.reshape(h.shape[0], -1)
    h = jax.nn.relu(jnp.dot(h, params["lin1_w"].T, precision=hp) + params["lin1_b"])
    return jnp.dot(h, params["lin2_w"].T, precision=hp) + params["lin2_b"]


if __name__ == "__main__":
    key = jax.random.PRNGKey(0)
    pkey, xkey = jax.random.split(key)
    encoded_space_dim = 4
    fc2_input_dim = 128  # unused by Encoder.forward, kept for parity with __init__

    params = init_params(pkey, encoded_space_dim)
    x = jax.random.normal(xkey, (2, 1, 28, 28), jnp.float32)  # batch=2, MNIST 28x28

    fwd = jax.jit(encoder_forward)
    out = jax.block_until_ready(fwd(params, x))
    assert out.shape == (2, encoded_space_dim)
    ref = encoder_reference(params, x)
    np.testing.assert_allclose(np.asarray(out), np.asarray(ref), rtol=1e-2, atol=2e-3)

    # Second shape: exercises batch padding (10 -> 16) and a different batch tile.
    x2 = jax.random.normal(jax.random.PRNGKey(1), (10, 1, 28, 28), jnp.float32)
    out2 = jax.block_until_ready(fwd(params, x2))
    assert out2.shape == (10, encoded_space_dim)
    ref2 = encoder_reference(params, x2)
    np.testing.assert_allclose(np.asarray(out2), np.asarray(ref2), rtol=1e-2, atol=2e-3)

    print("KERNEL_OK")
</pallas_src>

<mosaic_0001>
module attributes {stable_mosaic.version = 11 : i64} {
  func.func @_encoder_kernel(%arg0: i32, %arg1: memref<264x28xf32, #tpu.memory_space<vmem>>, %arg2: memref<3x28x128xf32, #tpu.memory_space<vmem>>, %arg3: memref<9x128x128xf32, #tpu.memory_space<vmem>>, %arg4: memref<128x128xf32, #tpu.memory_space<vmem>>, %arg5: memref<1x128xf32, #tpu.memory_space<vmem>>, %arg6: memref<8x128xf32, #tpu.memory_space<vmem>>, %arg7: memref<8x128xf32, #tpu.memory_space<vmem>>, %arg8: memref<136x128xf32, #tpu.memory_space<vmem>>, %arg9: memref<72x128xf32, #tpu.memory_space<vmem>>, %arg10: memref<32x128xf32, #tpu.memory_space<vmem>>) attributes {dimension_semantics = [#tpu.dimension_semantics<parallel>], iteration_bounds = array<i64: 1>, scalar_prefetch = 0 : i64, scratch_operands = 3 : i64, tpu.core_type = #tpu.core_type<tc>, window_params = [{transform_indices = @transform_0, window_bounds = array<i64: 264, 28>}, {pipeline_mode = #tpu.pipeline_mode<synchronous>, transform_indices = @transform_1, window_bounds = array<i64: 3, 28, 128>}, {pipeline_mode = #tpu.pipeline_mode<synchronous>, transform_indices = @transform_2, window_bounds = array<i64: 9, 128, 128>}, {pipeline_mode = #tpu.pipeline_mode<synchronous>, transform_indices = @transform_3, window_bounds = array<i64: 128, 128>}, {pipeline_mode = #tpu.pipeline_mode<synchronous>, transform_indices = @transform_4, window_bounds = array<i64: 1, 128>}, {pipeline_mode = #tpu.pipeline_mode<synchronous>, transform_indices = @transform_5, window_bounds = array<i64: 8, 128>}, {transform_indices = @transform_6, window_bounds = array<i64: 8, 128>}]} {
    %c7 = arith.constant 7 : index
    %c0 = arith.constant 0 : index
    %0 = tpu.strided_load %arg1[%c7, %c0] {strides = array<i32: 2, 1>} : memref<264x28xf32, #tpu.memory_space<vmem>>, vector<128x28xf32>
    %c0_0 = arith.constant 0 : index
    %c0_1 = arith.constant 0 : index
    %c0_2 = arith.constant 0 : index
    %1 = vector.load %arg2[%c0_0, %c0_1, %c0_2] : memref<3x28x128xf32, #tpu.memory_space<vmem>>, vector<1x28x128xf32>
    %2 = vector.shape_cast %1 : vector<1x28x128xf32> to vector<28x128xf32>
    %cst = arith.constant dense<0.000000e+00> : vector<128x128xf32>
    %3 = tpu.matmul %0, %2, %cst {dimension_numbers = #tpu.dot_dimension_numbers<[1], [0], [0], [1], [0, 0, 1, 1], [], []>} : vector<128x28xf32>, vector<28x128xf32>, vector<128x128xf32> -> vector<128x128xf32>
    %c8 = arith.constant 8 : index
    %c0_3 = arith.constant 0 : index
    %4 = tpu.strided_load %arg1[%c8, %c0_3] {strides = array<i32: 2, 1>} : memref<264x28xf32, #tpu.memory_space<vmem>>, vector<128x28xf32>
    %c1 = arith.constant 1 : index
    %c0_4 = arith.constant 0 : index
    %c0_5 = arith.constant 0 : index
    %5 = vector.load %arg2[%c1, %c0_4, %c0_5] : memref<3x28x128xf32, #tpu.memory_space<vmem>>, vector<1x28x128xf32>
    %6 = vector.shape_cast %5 : vector<1x28x128xf32> to vector<28x128xf32>
    %cst_6 = arith.constant dense<0.000000e+00> : vector<128x128xf32>
    %7 = tpu.matmul %4, %6, %cst_6 {dimension_numbers = #tpu.dot_dimension_numbers<[1], [0], [0], [1], [0, 0, 1, 1], [], []>} : vector<128x28xf32>, vector<28x128xf32>, vector<128x128xf32> -> vector<128x128xf32>
    %8 = arith.addf %3, %7 : vector<128x128xf32>
    %c9 = arith.constant 9 : index
    %c0_7 = arith.constant 0 : index
    %9 = tpu.strided_load %arg1[%c9, %c0_7] {strides = array<i32: 2, 1>} : memref<264x28xf32, #tpu.memory_space<vmem>>, vector<128x28xf32>
    %c2 = arith.constant 2 : index
    %c0_8 = arith.constant 0 : index
    %c0_9 = arith.constant 0 : index
    %10 = vector.load %arg2[%c2, %c0_8, %c0_9] : memref<3x28x128xf32, #tpu.memory_space<vmem>>, vector<1x28x128xf32>
    %11 = vector.shape_cast %10 : vector<1x28x128xf32> to vector<28x128xf32>
    %cst_10 = arith.constant dense<0.000000e+00> : vector<128x128xf32>
    %12 = tpu.matmul %9, %11, %cst_10 {dimension_numbers = #tpu.dot_dimension_numbers<[1], [0], [0], [1], [0, 0, 1, 1], [], []>} : vector<128x28xf32>, vector<28x128xf32>, vector<128x128xf32> -> vector<128x128xf32>
    %13 = arith.addf %8, %12 : vector<128x128xf32>
    %c0_11 = arith.constant 0 : index
    %c0_12 = arith.constant 0 : index
    %14 = vector.load %arg6[%c0_11, %c0_12] : memref<8x128xf32, #tpu.memory_space<vmem>>, vector<1x128xf32>
    %15 = vector.broadcast %14 : vector<1x128xf32> to vector<128x128xf32>
    %16 = arith.addf %13, %15 : vector<128x128xf32>
    %cst_13 = arith.constant 0.000000e+00 : f32
    %17 = vector.broadcast %cst_13 : f32 to vector<128x128xf32>
    %18 = arith.maximumf %16, %17 : vector<128x128xf32>
    %19 = tpu.iota {dimensions = array<i32: 0>} : vector<128x128xi32>
    %c16_i32 = arith.constant 16 : i32
    %c0_i32 = arith.constant 0 : i32
    %20 = arith.cmpi eq, %c16_i32, %c0_i32 : i32
    %c1_i32 = arith.constant 1 : i32
    %21 = arith.select %20, %c1_i32, %c16_i32 : i32
    %22 = vector.broadcast %21 : i32 to vector<128x128xi32>
    %23 = arith.remsi %19, %22 : vector<128x128xi32>
    %c0_i32_14 = arith.constant 0 : i32
    %24 = vector.broadcast %c0_i32_14 : i32 to vector<128x128xi32>
    %25 = arith.cmpi ne, %23, %24 : vector<128x128xi32>
    %c0_i32_15 = arith.constant 0 : i32
    %26 = vector.broadcast %c0_i32_15 : i32 to vector<128x128xi32>
    %27 = arith.cmpi slt, %23, %26 : vector<128x128xi32>
    %c0_i32_16 = arith.constant 0 : i32
    %28 = arith.cmpi slt, %21, %c0_i32_16 : i32
    %29 = vector.broadcast %28 : i1 to vector<128x128xi1>
    %30 = vector.broadcast %29 : vector<128x128xi1> to vector<128x128xi1>
    %31 = arith.xori %27, %30 : vector<128x128xi1>
    %32 = arith.andi %31, %25 : vector<128x128xi1>
    %33 = vector.broadcast %21 : i32 to vector<128x128xi32>
    %34 = arith.addi %23, %33 : vector<128x128xi32>
    %35 = arith.select %32, %34, %23 : vector<128x128xi1>, vector<128x128xi32>
    %c14_i32 = arith.constant 14 : i32
    %36 = vector.broadcast %c14_i32 : i32 to vector<128x128xi32>
    %37 = arith.cmpi slt, %35, %36 : vector<128x128xi32>
    %cst_17 = arith.constant 0.000000e+00 : f32
    %38 = vector.broadcast %cst_17 : f32 to vector<128x128xf32>
    %39 = arith.select %37, %18, %38 : vector<128x128xi1>, vector<128x128xf32>
    %cst_18 = arith.constant 0.000000e+00 : f32
    %40 = vector.broadcast %cst_18 : f32 to vector<8x128xf32>
    %c0_19 = arith.constant 0 : index
    %c0_20 = arith.constant 0 : index
    %41 = vector.load %arg8[%c0_19, %c0_20] : memref<136x128xf32, #tpu.memory_space<vmem>>, vector<8x128xf32>
    tpu.vector_store %arg8[%c0_19, %c0_20], %40 {strides = array<i32>} : memref<136x128xf32, #tpu.memory_space<vmem>>, vector<8x128xf32>,
    %c8_21 = arith.constant 8 : index
    %c0_22 = arith.constant 0 : index
    %42 = vector.load %arg8[%c8_21, %c0_22] : memref<136x128xf32, #tpu.memory_space<vmem>>, vector<128x128xf32>
    tpu.vector_store %arg8[%c8_21, %c0_22], %39 {strides = array<i32>} : memref<136x128xf32, #tpu.memory_space<vmem>>, vector<128x128xf32>,
    %c7_23 = arith.constant 7 : index
    %c0_24 = arith.constant 0 : index
    %43 = tpu.strided_load %arg8[%c7_23, %c0_24] {strides = array<i32: 2, 1>} : memref<136x128xf32, #tpu.memory_space<vmem>>, vector<64x128xf32>
    %c0_25 = arith.constant 0 : index
    %c0_26 = arith.constant 0 : index
    %c0_27 = arith.constant 0 : index
    %44 = vector.load %arg3[%c0_25, %c0_26, %c0_27] : memref<9x128x128xf32, #tpu.memory_space<vmem>>, vector<1x128x128xf32>
    %45 = vector.shape_cast %44 : vector<1x128x128xf32> to vector<128x128xf32>
    %cst_28 = arith.constant dense<0.000000e+00> : vector<64x128xf32>
    %46 = tpu.matmul %43, %45, %cst_28 {dimension_numbers = #tpu.dot_dimension_numbers<[1], [0], [0], [1], [0, 0, 1, 1], [], []>} : vector<64x128xf32>, vector<128x128xf32>, vector<64x128xf32> -> vector<64x128xf32>
    %c8_29 = arith.constant 8 : index
    %c0_30 = arith.constant 0 : index
    %47 = tpu.strided_load %arg8[%c8_29, %c0_30] {strides = array<i32: 2, 1>} : memref<136x128xf32, #tpu.memory_space<vmem>>, vector<64x128xf32>
    %c1_31 = arith.constant 1 : index
    %c0_32 = arith.constant 0 : index
    %c0_33 = arith.constant 0 : index
    %48 = vector.load %arg3[%c1_31, %c0_32, %c0_33] : memref<9x128x128xf32, #tpu.memory_space<vmem>>, vector<1x128x128xf32>
    %49 = vector.shape_cast %48 : vector<1x128x128xf32> to vector<128x128xf32>
    %cst_34 = arith.constant dense<0.000000e+00> : vector<64x128xf32>
    %50 = tpu.matmul %47, %49, %cst_34 {dimension_numbers = #tpu.dot_dimension_numbers<[1], [0], [0], [1], [0, 0, 1, 1], [], []>} : vector<64x128xf32>, vector<128x128xf32>, vector<64x128xf32> -> vector<64x128xf32>
    %51 = arith.addf %46, %50 : vector<64x128xf32>
    %c9_35 = arith.constant 9 : index
    %c0_36 = arith.constant 0 : index
    %52 = tpu.strided_load %arg8[%c9_35, %c0_36] {strides = array<i32: 2, 1>} : memref<136x128xf32, #tpu.memory_space<vmem>>, vector<64x128xf32>
    %c2_37 = arith.constant 2 : index
    %c0_38 = arith.constant 0 : index
    %c0_39 = arith.constant 0 : index
    %53 = vector.load %arg3[%c2_37, %c0_38, %c0_39] : memref<9x128x128xf32, #tpu.memory_space<vmem>>, vector<1x128x128xf32>
    %54 = vector.shape_cast %53 : vector<1x128x128xf32> to vector<128x128xf32>
    %cst_40 = arith.constant dense<0.000000e+00> : vector<64x128xf32>
    %55 = tpu.matmul %52, %54, %cst_40 {dimension_numbers = #tpu.dot_dimension_numbers<[1], [0], [0], [1], [0, 0, 1, 1], [], []>} : vector<64x128xf32>, vector<128x128xf32>, vector<64x128xf32> -> vector<64x128xf32>
    %56 = arith.addf %51, %55 : vector<64x128xf32>
    %c1_41 = arith.constant 1 : index
    %c0_42 = arith.constant 0 : index
    %57 = vector.load %arg6[%c1_41, %c0_42] : memref<8x128xf32, #tpu.memory_space<vmem>>, vector<1x128xf32>
    %58 = vector.broadcast %57 : vector<1x128xf32> to vector<64x128xf32>
    %59 = arith.mulf %56, %58 : vector<64x128xf32>
    %c2_43 = arith.constant 2 : index
    %c0_44 = arith.constant 0 : index
    %60 = vector.load %arg6[%c2_43, %c0_44] : memref<8x128xf32, #tpu.memory_space<vmem>>, vector<1x128xf32>
    %61 = vector.broadcast %60 : vector<1x128xf32> to vector<64x128xf32>
    %62 = arith.addf %59, %61 : vector<64x128xf32>
    %cst_45 = arith.constant 0.000000e+00 : f32
    %63 = vector.broadcast %cst_45 : f32 to vector<64x128xf32>
    %64 = arith.maximumf %62, %63 : vector<64x128xf32>
    %c0_46 = arith.constant 0 : index
    %c0_47 = arith.constant 0 : index
    %65 = vector.load %arg9[%c0_46, %c0_47] : memref<72x128xf32, #tpu.memory_space<vmem>>, vector<64x128xf32>
    tpu.vector_store %arg9[%c0_46, %c0_47], %64 {strides = array<i32>} : memref<72x128xf32, #tpu.memory_space<vmem>>, vector<64x128xf32>,
    %cst_48 = arith.constant 0.000000e+00 : f32
    %66 = vector.broadcast %cst_48 : f32 to vector<8x128xf32>
    %c64 = arith.constant 64 : index
    %c0_49 = arith.constant 0 : index
    %67 = vector.load %arg9[%c64, %c0_49] : memref<72x128xf32, #tpu.memory_space<vmem>>, vector<8x128xf32>
    tpu.vector_store %arg9[%c64, %c0_49], %66 {strides = array<i32>} : memref<72x128xf32, #tpu.memory_space<vmem>>, vector<8x128xf32>,
    %c0_50 = arith.constant 0 : index
    %c0_51 = arith.constant 0 : index
    %68 = tpu.strided_load %arg9[%c0_50, %c0_51] {strides = array<i32: 2, 1>} : memref<72x128xf32, #tpu.memory_space<vmem>>, vector<32x128xf32>
    %c3 = arith.constant 3 : index
    %c0_52 = arith.constant 0 : index
    %c0_53 = arith.constant 0 : index
    %69 = vector.load %arg3[%c3, %c0_52, %c0_53] : memref<9x128x128xf32, #tpu.memory_space<vmem>>, vector<1x128x128xf32>
    %70 = vector.shape_cast %69 : vector<1x128x128xf32> to vector<128x128xf32>
    %cst_54 = arith.constant dense<0.000000e+00> : vector<32x128xf32>
    %71 = tpu.matmul %68, %70, %cst_54 {dimension_numbers = #tpu.dot_dimension_numbers<[1], [0], [0], [1], [0, 0, 1, 1], [], []>} : vector<32x128xf32>, vector<128x128xf32>, vector<32x128xf32> -> vector<32x128xf32>
    %c1_55 = arith.constant 1 : index
    %c0_56 = arith.constant 0 : index
    %72 = tpu.strided_load %arg9[%c1_55, %c0_56] {strides = array<i32: 2, 1>} : memref<72x128xf32, #tpu.memory_space<vmem>>, vector<32x128xf32>
    %c4 = arith.constant 4 : index
    %c0_57 = arith.constant 0 : index
    %c0_58 = arith.constant 0 : index
    %73 = vector.load %arg3[%c4, %c0_57, %c0_58] : memref<9x128x128xf32, #tpu.memory_space<vmem>>, vector<1x128x128xf32>
    %74 = vector.shape_cast %73 : vector<1x128x128xf32> to vector<128x128xf32>
    %cst_59 = arith.constant dense<0.000000e+00> : vector<32x128xf32>
    %75 = tpu.matmul %72, %74, %cst_59 {dimension_numbers = #tpu.dot_dimension_numbers<[1], [0], [0], [1], [0, 0, 1, 1], [], []>} : vector<32x128xf32>, vector<128x128xf32>, vector<32x128xf32> -> vector<32x128xf32>
    %76 = arith.addf %71, %75 : vector<32x128xf32>
    %c2_60 = arith.constant 2 : index
    %c0_61 = arith.constant 0 : index
    %77 = tpu.strided_load %arg9[%c2_60, %c0_61] {strides = array<i32: 2, 1>} : memref<72x128xf32, #tpu.memory_space<vmem>>, vector<32x128xf32>
    %c5 = arith.constant 5 : index
    %c0_62 = arith.constant 0 : index
    %c0_63 = arith.constant 0 : index
    %78 = vector.load %arg3[%c5, %c0_62, %c0_63] : memref<9x128x128xf32, #tpu.memory_space<vmem>>, vector<1x128x128xf32>
    %79 = vector.shape_cast %78 : vector<1x128x128xf32> to vector<128x128xf32>
    %cst_64 = arith.constant dense<0.000000e+00> : vector<32x128xf32>
    %80 = tpu.matmul %77, %79, %cst_64 {dimension_numbers = #tpu.dot_dimension_numbers<[1], [0], [0], [1], [0, 0, 1, 1], [], []>} : vector<32x128xf32>, vector<128x128xf32>, vector<32x128xf32> -> vector<32x128xf32>
    %81 = arith.addf %76, %80 : vector<32x128xf32>
    %c3_65 = arith.constant 3 : index
    %c0_66 = arith.constant 0 : index
    %82 = vector.load %arg6[%c3_65, %c0_66] : memref<8x128xf32, #tpu.memory_space<vmem>>, vector<1x128xf32>
    %83 = vector.broadcast %82 : vector<1x128xf32> to vector<32x128xf32>
    %84 = arith.addf %81, %83 : vector<32x128xf32>
    %cst_67 = arith.constant 0.000000e+00 : f32
    %85 = vector.broadcast %cst_67 : f32 to vector<32x128xf32>
    %86 = arith.maximumf %84, %85 : vector<32x128xf32>
    %c0_68 = arith.constant 0 : index
    %c0_69 = arith.constant 0 : index
    %87 = vector.load %arg10[%c0_68, %c0_69] : memref<32x128xf32, #tpu.memory_space<vmem>>, vector<32x128xf32>
    tpu.vector_store %arg10[%c0_68, %c0_69], %86 {strides = array<i32>} : memref<32x128xf32, #tpu.memory_space<vmem>>, vector<32x128xf32>,
    %c0_70 = arith.constant 0 : index
    %c0_71 = arith.constant 0 : index
    %88 = tpu.strided_load %arg10[%c0_70, %c0_71] {strides = array<i32: 4, 1>} : memref<32x128xf32, #tpu.memory_space<vmem>>, vector<8x128xf32>
    %c6 = arith.constant 6 : index
    %c0_72 = arith.constant 0 : index
    %c0_73 = arith.constant 0 : index
    %89 = vector.load %arg3[%c6, %c0_72, %c0_73] : memref<9x128x128xf32, #tpu.memory_space<vmem>>, vector<1x128x128xf32>
    %90 = vector.shape_cast %89 : vector<1x128x128xf32> to vector<128x128xf32>
    %cst_74 = arith.constant dense<0.000000e+00> : vector<8x128xf32>
    %91 = tpu.matmul %88, %90, %cst_74 {dimension_numbers = #tpu.dot_dimension_numbers<[1], [0], [0], [1], [0, 0, 1, 1], [], []>} : vector<8x128xf32>, vector<128x128xf32>, vector<8x128xf32> -> vector<8x128xf32>
    %c1_75 = arith.constant 1 : index
    %c0_76 = arith.constant 0 : index
    %92 = tpu.strided_load %arg10[%c1_75, %c0_76] {strides = array<i32: 4, 1>} : memref<32x128xf32, #tpu.memory_space<vmem>>, vector<8x128xf32>
    %c7_77 = arith.constant 7 : index
    %c0_78 = arith.constant 0 : index
    %c0_79 = arith.constant 0 : index
    %93 = vector.load %arg3[%c7_77, %c0_78, %c0_79] : memref<9x128x128xf32, #tpu.memory_space<vmem>>, vector<1x128x128xf32>
    %94 = vector.shape_cast %93 : vector<1x128x128xf32> to vector<128x128xf32>
    %cst_80 = arith.constant dense<0.000000e+00> : vector<8x128xf32>
    %95 = tpu.matmul %92, %94, %cst_80 {dimension_numbers = #tpu.dot_dimension_numbers<[1], [0], [0], [1], [0, 0, 1, 1], [], []>} : vector<8x128xf32>, vector<128x128xf32>, vector<8x128xf32> -> vector<8x128xf32>
    %96 = arith.addf %91, %95 : vector<8x128xf32>
    %c2_81 = arith.constant 2 : index
    %c0_82 = arith.constant 0 : index
    %97 = tpu.strided_load %arg10[%c2_81, %c0_82] {strides = array<i32: 4, 1>} : memref<32x128xf32, #tpu.memory_space<vmem>>, vector<8x128xf32>
    %c8_83 = arith.constant 8 : index
    %c0_84 = arith.constant 0 : index
    %c0_85 = arith.constant 0 : index
    %98 = vector.load %arg3[%c8_83, %c0_84, %c0_85] : memref<9x128x128xf32, #tpu.memory_space<vmem>>, vector<1x128x128xf32>
    %99 = vector.shape_cast %98 : vector<1x128x128xf32> to vector<128x128xf32>
    %cst_86 = arith.constant dense<0.000000e+00> : vector<8x128xf32>
    %100 = tpu.matmul %97, %99, %cst_86 {dimension_numbers = #tpu.dot_dimension_numbers<[1], [0], [0], [1], [0, 0, 1, 1], [], []>} : vector<8x128xf32>, vector<128x128xf32>, vector<8x128xf32> -> vector<8x128xf32>
    %101 = arith.addf %96, %100 : vector<8x128xf32>
    %c4_87 = arith.constant 4 : index
    %c0_88 = arith.constant 0 : index
    %102 = vector.load %arg6[%c4_87, %c0_88] : memref<8x128xf32, #tpu.memory_space<vmem>>, vector<1x128xf32>
    %103 = vector.broadcast %102 : vector<1x128xf32> to vector<8x128xf32>
    %104 = arith.addf %101, %103 : vector<8x128xf32>
    %cst_89 = arith.constant 0.000000e+00 : f32
    %105 = vector.broadcast %cst_89 : f32 to vector<8x128xf32>
    %106 = arith.maximumf %104, %105 : vector<8x128xf32>
    %c0_90 = arith.constant 0 : index
    %c0_91 = arith.constant 0 : index
    %107 = vector.load %arg4[%c0_90, %c0_91] : memref<128x128xf32, #tpu.memory_space<vmem>>, vector<128x128xf32>
    %cst_92 = arith.constant dense<0.000000e+00> : vector<8x128xf32>
    %108 = tpu.matmul %106, %107, %cst_92 {dimension_numbers = #tpu.dot_dimension_numbers<[1], [0], [0], [1], [0, 0, 1, 1], [], []>} : vector<8x128xf32>, vector<128x128xf32>, vector<8x128xf32> -> vector<8x128xf32>
    %c0_93 = arith.constant 0 : index
    %c0_94 = arith.constant 0 : index
    %109 = vector.load %arg5[%c0_93, %c0_94] : memref<1x128xf32, #tpu.memory_space<vmem>>, vector<1x128xf32>
    %110 = vector.broadcast %109 : vector<1x128xf32> to vector<8x128xf32>
    %111 = arith.addf %108, %110 : vector<8x128xf32>
    %c0_95 = arith.constant 0 : index
    %c0_96 = arith.constant 0 : index
    %112 = vector.load %arg7[%c0_95, %c0_96] : memref<8x128xf32, #tpu.memory_space<vmem>>, vector<8x128xf32>
    tpu.vector_store %arg7[%c0_95, %c0_96], %111 {strides = array<i32>} : memref<8x128xf32, #tpu.memory_space<vmem>>, vector<8x128xf32>,
    return
  }
  func.func @transform_0(%arg0: i32) -> (i32, i32) {
    %c0_i32 = arith.constant 0 : i32
    %c0_i32_0 = arith.constant 0 : i32
    return %arg0, %c0_i32 : i32, i32
  }
  func.func @transform_1(%arg0: i32) -> (i32, i32, i32) {
    %c0_i32 = arith.constant 0 : i32
    %c0_i32_0 = arith.constant 0 : i32
    %c0_i32_1 = arith.constant 0 : i32
    %c0_i32_2 = arith.constant 0 : i32
    return %c0_i32, %c0_i32_0, %c0_i32_1 : i32, i32, i32
  }
  func.func @transform_2(%arg0: i32) -> (i32, i32, i32) {
    %c0_i32 = arith.constant 0 : i32
    %c0_i32_0 = arith.constant 0 : i32
    %c0_i32_1 = arith.constant 0 : i32
    %c0_i32_2 = arith.constant 0 : i32
    return %c0_i32, %c0_i32_0, %c0_i32_1 : i32, i32, i32
  }
  func.func @transform_3(%arg0: i32) -> (i32, i32) {
    %c0_i32 = arith.constant 0 : i32
    %c0_i32_0 = arith.constant 0 : i32
    %c0_i32_1 = arith.constant 0 : i32
    return %c0_i32, %c0_i32_0 : i32, i32
  }
  func.func @transform_4(%arg0: i32) -> (i32, i32) {
    %c0_i32 = arith.constant 0 : i32
    %c0_i32_0 = arith.constant 0 : i32
    %c0_i32_1 = arith.constant 0 : i32
    return %c0_i32, %c0_i32_0 : i32, i32
  }
  func.func @transform_5(%arg0: i32) -> (i32, i32) {
    %c0_i32 = arith.constant 0 : i32
    %c0_i32_0 = arith.constant 0 : i32
    %c0_i32_1 = arith.constant 0 : i32
    return %c0_i32, %c0_i32_0 : i32, i32
  }
  func.func @transform_6(%arg0: i32) -> (i32, i32) {
    %c0_i32 = arith.constant 0 : i32
    %c0_i32_0 = arith.constant 0 : i32
    return %arg0, %c0_i32 : i32, i32
  }
}

</mosaic_0001>

<llo_original>
// kernel: tile.28
$region0: #{tile.28}
  #allocation0 [shape = 's32[1]{0}', space=sflag, size = 0x4, scoped, tag = 'scoped memory for tile.28']
  %s0 = inlined_call_operand.vmem [shape: f32[16], index: 0, kind: input, shape index: {}]
  %s1 = inlined_call_operand.vmem [shape: f32[7,16], index: 1, kind: output, shape index: {}]
  // Predicated region
  $region2: #{tile.28} parent=0 // pred_check
    _
  $region3: #{tile.28} parent=0 // pred_check_branch
    %3 = sbr.rel (0) target = $region5
  $region4: #{tile.28} parent=0 // pred_region
    _
  $region5: #{tile.28} parent=0 // pred_fallthru
    _
  %v4 = vld [vmem:[%s0] ss:$0 sm:$0xff]
  %5 = vst [vmem:[%s1] sm:$0xff] %v4

// kernel: tile.23
$region0: #{tile.23}
  #allocation2 [shape = 's32[1]{0}', space=sflag, size = 0x4, scoped, tag = 'scoped memory for tile.23']
  %s0 = inlined_call_operand.hbm [shape: f32[8], index: 0, kind: input, shape index: {}]
  %s1 = inlined_call_operand.vmem [shape: f32[14,8], index: 1, kind: output, shape index: {}]
  $region1: #{tile.23} parent=0
    #allocation0 [shape = 'u8[512]{0}', space=vmem, size = 0x400, scoped, tag = 'operand span for operand 0']
    #allocation1 [shape = 's32[1]{0}', space=sflag, size = 0x4, scoped, tag = 'scoped memory for tile.23']
    %2 = vsyncpa [#allocation1], 0
    // Predicated region
    $region2: #{tile.23} parent=1 // pred_check
      _
    $region3: #{tile.23} parent=1 // pred_check_branch
      %4 = sbr.rel (0) target = $region5
    $region4: #{tile.23} parent=1 // pred_region
      %6 = vsyncadd [#allocation1], 0
      %s8 = sshll.u32 %s0, 4
      %s9 = int_to_ptr.hbm [resolvable:$true] %s8
      %s10 = sshll.u32 [#allocation0], 4
      %s11 = int_to_ptr.vmem [resolvable:$true] %s10
      %13 = dma.hbm_to_vmem [thread:$0]  %s9, 16, %s11, [#allocation1]
    $region5: #{tile.23} parent=1 // pred_fallthru
      _
    // Predicated region
    $region6: #{tile.23} parent=1 // pred_check
      _
    $region7: #{tile.23} parent=1 // pred_check_branch
      %15 = sbr.rel (0) target = $region9
    $region8: #{tile.23} parent=1 // pred_region
      %17 = dma.done [#allocation1], 16
    $region9: #{tile.23} parent=1 // pred_fallthru
      _
    %v18 = vld [vmem:[#allocation0] ss:$0 sm:$0xff]
    %19 = vst [vmem:[%s1] sm:$0xff] %v18
    %s20 = scalar_lea.vmem %s1, 8
    %21 = vst [vmem:[%s20] sm:$0xff] %v18
    %22 = vsyncpa [#allocation1], 1

// kernel: tile.38
$region0: #{tile.38}
  #allocation2 [shape = 's32[1]{0}', space=sflag, size = 0x4, scoped, tag = 'scoped memory for tile.38']
  %s0 = inlined_call_operand.hbm [shape: f32[32], index: 0, kind: input, shape index: {}]
  %s1 = inlined_call_operand.vmem [shape: f32[3,32], index: 1, kind: output, shape index: {}]
  $region1: #{tile.38} parent=0
    #allocation0 [shape = 'u8[512]{0}', space=vmem, size = 0x400, scoped, tag = 'operand span for operand 0']
    #allocation1 [shape = 's32[1]{0}', space=sflag, size = 0x4, scoped, tag = 'scoped memory for tile.38']
    %2 = vsyncpa [#allocation1], 0
    // Predicated region
    $region2: #{tile.38} parent=1 // pred_check
      _
    $region3: #{tile.38} parent=1 // pred_check_branch
      %4 = sbr.rel (0) target = $region5
    $region4: #{tile.38} parent=1 // pred_region
      %6 = vsyncadd [#allocation1], 0
      %s8 = sshll.u32 %s0, 4
      %s9 = int_to_ptr.hbm [resolvable:$true] %s8
      %s10 = sshll.u32 [#allocation0], 4
      %s11 = int_to_ptr.vmem [resolvable:$true] %s10
      %13 = dma.hbm_to_vmem [thread:$0]  %s9, 16, %s11, [#allocation1]
    $region5: #{tile.38} parent=1 // pred_fallthru
      _
    // Predicated region
    $region6: #{tile.38} parent=1 // pred_check
      _
    $region7: #{tile.38} parent=1 // pred_check_branch
      %15 = sbr.rel (0) target = $region9
    $region8: #{tile.38} parent=1 // pred_region
      %17 = dma.done [#allocation1], 16
    $region9: #{tile.38} parent=1 // pred_fallthru
      _
    %v18 = vld [vmem:[#allocation0] ss:$0 sm:$0xff]
    %19 = vst [vmem:[%s1] sm:$0xf] %v18
    %20 = vsyncpa [#allocation1], 1

// kernel: encoder_forward.1
$region0: #{encoder_forward.1}
  #allocation0 [shape = 'u32[]', space=smem, size = 0x4, offset = 0x4, fixed_abs, tag = 'smem constant byte address 0x4 - core index']
  #allocation1 [shape = 'u32[72,128]{1,0:T(1,128)}', space=vmem, size = 0x9000, scoped, tag = 'internal scratch']
  #allocation2 [shape = 'f32[136,128]{1,0:T(8,128)}', space=vmem, size = 0x11000, scoped, tag = 'scratch operand']
  #allocation3 [shape = 'f32[72,128]{1,0:T(8,128)}', space=vmem, size = 0x9000, scoped, tag = 'scratch operand']
  #allocation4 [shape = 'f32[32,128]{1,0:T(8,128)}', space=vmem, size = 0x4000, scoped, tag = 'scratch operand']
  %s0 = inlined_call_operand.vmem [shape: f32[264,28], index: 0, kind: input, shape index: {}]
  %s1 = inlined_call_operand.vmem [shape: f32[3,28,128], index: 1, kind: input, shape index: {}]
  %s2 = inlined_call_operand.vmem [shape: f32[9,128,128], index: 2, kind: input, shape index: {}]
  %s3 = inlined_call_operand.vmem [shape: f32[128,128], index: 3, kind: input, shape index: {}]
  %s4 = inlined_call_operand.vmem [shape: f32[1,128], index: 4, kind: input, shape index: {}]
  %s5 = inlined_call_operand.vmem [shape: f32[8,128], index: 5, kind: input, shape index: {}]
  %s6 = inlined_call_operand.vmem [shape: f32[8,128], index: 6, kind: output, shape index: {}]
  %s7 = sld [smem:[#allocation0]]
  $region34: #{encoder_forward.1} parent=0
    _
  %s9 = ssub.s32 1, %s7
  %s10 = scalar_select 0, %s9, %s7
  // Predicated region
  $region2: #{encoder_forward.1} parent=0 // pred_check
    _
  $region3: #{encoder_forward.1} parent=0 // pred_check_branch
    %12 = sbr.rel (0) target = $region5
  $region4: #{encoder_forward.1} parent=0 // pred_region
    _
  $region5: #{encoder_forward.1} parent=0 // pred_fallthru
    _
  // Predicated region
  $region6: #{encoder_forward.1} parent=0 // pred_check
    _
  $region7: #{encoder_forward.1} parent=0 // pred_check_branch
    %14 = sbr.rel (0) target = $region9
  $region8: #{encoder_forward.1} parent=0 // pred_region
    _
  $region9: #{encoder_forward.1} parent=0 // pred_fallthru
    _
  // Predicated region
  $region10: #{encoder_forward.1} parent=0 // pred_check
    _
  $region11: #{encoder_forward.1} parent=0 // pred_check_branch
    %16 = sbr.rel (0) target = $region13
  $region12: #{encoder_forward.1} parent=0 // pred_region
    _
  $region13: #{encoder_forward.1} parent=0 // pred_fallthru
    _
  // Predicated region
  $region14: #{encoder_forward.1} parent=0 // pred_check
    _
  $region15: #{encoder_forward.1} parent=0 // pred_check_branch
    %18 = sbr.rel (0) target = $region17
  $region16: #{encoder_forward.1} parent=0 // pred_region
    _
  $region17: #{encoder_forward.1} parent=0 // pred_fallthru
    _
  // Predicated region
  $region18: #{encoder_forward.1} parent=0 // pred_check
    _
  $region19: #{encoder_forward.1} parent=0 // pred_check_branch
    %20 = sbr.rel (0) target = $region21
  $region20: #{encoder_forward.1} parent=0 // pred_region
    _
  $region21: #{encoder_forward.1} parent=0 // pred_fallthru
    _
  // Predicated region
  $region22: #{encoder_forward.1} parent=0 // pred_check
    _
  $region23: #{encoder_forward.1} parent=0 // pred_check_branch
    %22 = sbr.rel (0) target = $region25
  $region24: #{encoder_forward.1} parent=0 // pred_region
    _
  $region25: #{encoder_forward.1} parent=0 // pred_fallthru
    _
  %s23 = scalar_lea.vmem %s0, 7
  %v24 = vld [vmem:[%s23] ss:$2 sm:$0xff]
  %s25 = scalar_lea.vmem %s0, 23
  %v26 = vld [vmem:[%s25] ss:$2 sm:$0xff]
  %s27 = scalar_lea.vmem %s0, 39
  %v28 = vld [vmem:[%s27] ss:$2 sm:$0xff]
  %s29 = scalar_lea.vmem %s0, 55
  %v30 = vld [vmem:[%s29] ss:$2 sm:$0xff]
  %s31 = scalar_lea.vmem %s0, 71
  %v32 = vld [vmem:[%s31] ss:$2 sm:$0xff]
  %s33 = scalar_lea.vmem %s0, 87
  %v34 = vld [vmem:[%s33] ss:$2 sm:$0xff]
  %s35 = scalar_lea.vmem %s0, 103
  %v36 = vld [vmem:[%s35] ss:$2 sm:$0xff]
  %s37 = scalar_lea.vmem %s0, 119
  %v38 = vld [vmem:[%s37] ss:$2 sm:$0xff]
  %s39 = scalar_lea.vmem %s0, 135
  %v40 = vld [vmem:[%s39] ss:$2 sm:$0xff]
  %s41 = scalar_lea.vmem %s0, 151
  %v42 = vld [vmem:[%s41] ss:$2 sm:$0xff]
  %s43 = scalar_lea.vmem %s0, 167
  %v44 = vld [vmem:[%s43] ss:$2 sm:$0xff]
  %s45 = scalar_lea.vmem %s0, 183
  %v46 = vld [vmem:[%s45] ss:$2 sm:$0xff]
  %s47 = scalar_lea.vmem %s0, 199
  %v48 = vld [vmem:[%s47] ss:$2 sm:$0xff]
  %s49 = scalar_lea.vmem %s0, 215
  %v50 = vld [vmem:[%s49] ss:$2 sm:$0xff]
  %s51 = scalar_lea.vmem %s0, 231
  %v52 = vld [vmem:[%s51] ss:$2 sm:$0xff]
  %s53 = scalar_lea.vmem %s0, 247
  %v54 = vld [vmem:[%s53] ss:$2 sm:$0xff]
  %v55 = vld [vmem:[%s1] sm:$0xff]
  %v56 = vld [vmem:[%s1 + $0x8] sm:$0xff]
  %v57 = vld [vmem:[%s1 + $0x10] sm:$0xff]
  %v58 = vld [vmem:[%s1 + $0x18] sm:$0xf]
  %s59 = scalar_lea.vmem %s0, 8
  %v60 = vld [vmem:[%s59] ss:$2 sm:$0xff]
  %s61 = scalar_lea.vmem %s0, 24
  %v62 = vld [vmem:[%s61] ss:$2 sm:$0xff]
  %s63 = scalar_lea.vmem %s0, 40
  %v64 = vld [vmem:[%s63] ss:$2 sm:$0xff]
  %s65 = scalar_lea.vmem %s0, 56
  %v66 = vld [vmem:[%s65] ss:$2 sm:$0xff]
  %s67 = scalar_lea.vmem %s0, 72
  %v68 = vld [vmem:[%s67] ss:$2 sm:$0xff]
  %s69 = scalar_lea.vmem %s0, 88
  %v70 = vld [vmem:[%s69] ss:$2 sm:$0xff]
  %s71 = scalar_lea.vmem %s0, 104
  %v72 = vld [vmem:[%s71] ss:$2 sm:$0xff]
  %s73 = scalar_lea.vmem %s0, 120
  %v74 = vld [vmem:[%s73] ss:$2 sm:$0xff]
  %s75 = scalar_lea.vmem %s0, 136
  %v76 = vld [vmem:[%s75] ss:$2 sm:$0xff]
  %s77 = scalar_lea.vmem %s0, 152
  %v78 = vld [vmem:[%s77] ss:$2 sm:$0xff]
  %s79 = scalar_lea.vmem %s0, 168
  %v80 = vld [vmem:[%s79] ss:$2 sm:$0xff]
  %s81 = scalar_lea.vmem %s0, 184
  %v82 = vld [vmem:[%s81] ss:$2 sm:$0xff]
  %s83 = scalar_lea.vmem %s0, 200
  %v84 = vld [vmem:[%s83] ss:$2 sm:$0xff]
  %s85 = scalar_lea.vmem %s0, 216
  %v86 = vld [vmem:[%s85] ss:$2 sm:$0xff]
  %s87 = scalar_lea.vmem %s0, 232
  %v88 = vld [vmem:[%s87] ss:$2 sm:$0xff]
  %s89 = scalar_lea.vmem %s0, 248
  %v90 = vld [vmem:[%s89] ss:$2 sm:$0xff]
  %s91 = scalar_lea.vmem %s1, 32
  %v92 = vld [vmem:[%s91] sm:$0xff]
  %v93 = vld [vmem:[%s91 + $0x8] sm:$0xff]
  %v94 = vld [vmem:[%s91 + $0x10] sm:$0xff]
  %v95 = vld [vmem:[%s91 + $0x18] sm:$0xf]
  %vm96 = vcmask 228352
  %v98 = vsel %vm96, %v60, 0
  %v101 = vsel %vm96, %v62, 0
  %v104 = vsel %vm96, %v64, 0
  %v107 = vsel %vm96, %v66, 0
  %v110 = vsel %vm96, %v68, 0
  %v113 = vsel %vm96, %v70, 0
  %v116 = vsel %vm96, %v72, 0
  %v119 = vsel %vm96, %v74, 0
  %v122 = vsel %vm96, %v76, 0
  %v125 = vsel %vm96, %v78, 0
  %v128 = vsel %vm96, %v80, 0
  %v131 = vsel %vm96, %v82, 0
  %v134 = vsel %vm96, %v84, 0
  %v137 = vsel %vm96, %v86, 0
  %v140 = vsel %vm96, %v88, 0
  %v143 = vsel %vm96, %v90, 0
  %vm145 = vcmask 1043456
  %v147 = vsel %vm145, %v95, 0
  %149 = vmatpush.msra.mxu0 0.0
  %150 = vmatpush.msra.mxu0 0.0
  %151 = vmatpush.msra.mxu0 0.0
  %152 = vmatpush.msra.mxu0 0.0
  %153 = vmatpush.msra.mxu0 0.0
  %154 = vmatpush.msra.mxu0 0.0
  %155 = vmatpush.msra.mxu0 0.0
  %156 = vmatpush.msra.mxu0 0.0
  %157 = vmatpush.msra.mxu0 0.0
  %158 = vmatpush.msra.mxu0 0.0
  %159 = vmatpush.msra.mxu0 0.0
  %160 = vmatpush.msra.mxu0 0.0
  %161 = vmatpush.msra.mxu0 %v147
  %162 = vmatpush.msra.mxu0 %v94
  %163 = vmatpush.msra.mxu0 %v93
  %164 = vmatpush.msra.mxu0 %v92
  %165 = vmatmul.f32.gmra.mxu0 %v98
  %v166 = vpop.f32.mrf.mxu0
  %v167 = vadd.f32 0.0, %v166
  %168 = vmatmul.f32.gmra.mxu0 %v101
  %v169 = vpop.f32.mrf.mxu0
  %v170 = vadd.f32 0.0, %v169
  %171 = vmatmul.f32.gmra.mxu0 %v104
  %v172 = vpop.f32.mrf.mxu0
  %v173 = vadd.f32 0.0, %v172
  %174 = vmatmul.f32.gmra.mxu0 %v107
  %v175 = vpop.f32.mrf.mxu0
  %v176 = vadd.f32 0.0, %v175
  %177 = vmatmul.f32.gmra.mxu0 %v110
  %v178 = vpop.f32.mrf.mxu0
  %v179 = vadd.f32 0.0, %v178
  %180 = vmatmul.f32.gmra.mxu0 %v113
  %v181 = vpop.f32.mrf.mxu0
  %v182 = vadd.f32 0.0, %v181
  %183 = vmatmul.f32.gmra.mxu0 %v116
  %v184 = vpop.f32.mrf.mxu0
  %v185 = vadd.f32 0.0, %v184
  %186 = vmatmul.f32.gmra.mxu0 %v119
  %v187 = vpop.f32.mrf.mxu0
  %v188 = vadd.f32 0.0, %v187
  %189 = vmatmul.f32.gmra.mxu0 %v122
  %v190 = vpop.f32.mrf.mxu0
  %v191 = vadd.f32 0.0, %v190
  %192 = vmatmul.f32.gmra.mxu0 %v125
  %v193 = vpop.f32.mrf.mxu0
  %v194 = vadd.f32 0.0, %v193
  %195 = vmatmul.f32.gmra.mxu0 %v128
  %v196 = vpop.f32.mrf.mxu0
  %v197 = vadd.f32 0.0, %v196
  %198 = vmatmul.f32.gmra.mxu0 %v131
  %v199 = vpop.f32.mrf.mxu0
  %v200 = vadd.f32 0.0, %v199
  %201 = vmatmul.f32.gmra.mxu0 %v134
  %v202 = vpop.f32.mrf.mxu0
  %v203 = vadd.f32 0.0, %v202
  %204 = vmatmul.f32.gmra.mxu0 %v137
  %v205 = vpop.f32.mrf.mxu0
  %v206 = vadd.f32 0.0, %v205
  %207 = vmatmul.f32.gmra.mxu0 %v140
  %v208 = vpop.f32.mrf.mxu0
  %v209 = vadd.f32 0.0, %v208
  %210 = vmatmul.f32.gmra.mxu0 %v143
  %v211 = vpop.f32.mrf.mxu0
  %v212 = vadd.f32 0.0, %v211
  %213 = vdwg.mxu0
  %v215 = vsel %vm96, %v24, 0
  %v218 = vsel %vm96, %v26, 0
  %v221 = vsel %vm96, %v28, 0
  %v224 = vsel %vm96, %v30, 0
  %v227 = vsel %vm96, %v32, 0
  %v230 = vsel %vm96, %v34, 0
  %v233 = vsel %vm96, %v36, 0
  %v236 = vsel %vm96, %v38, 0
  %v239 = vsel %vm96, %v40, 0
  %v242 = vsel %vm96, %v42, 0
  %v245 = vsel %vm96, %v44, 0
  %v248 = vsel %vm96, %v46, 0
  %v251 = vsel %vm96, %v48, 0
  %v254 = vsel %vm96, %v50, 0
  %v257 = vsel %vm96, %v52, 0
  %v260 = vsel %vm96, %v54, 0
  %v263 = vsel %vm145, %v58, 0
  %265 = vmatpush.msra.mxu0 0.0
  %266 = vmatpush.msra.mxu0 0.0
  %267 = vmatpush.msra.mxu0 0.0
  %268 = vmatpush.msra.mxu0 0.0
  %269 = vmatpush.msra.mxu0 0.0
  %270 = vmatpush.msra.mxu0 0.0
  %271 = vmatpush.msra.mxu0 0.0
  %272 = vmatpush.msra.mxu0 0.0
  %273 = vmatpush.msra.mxu0 0.0
  %274 = vmatpush.msra.mxu0 0.0
  %275 = vmatpush.msra.mxu0 0.0
  %276 = vmatpush.msra.mxu0 0.0
  %277 = vmatpush.msra.mxu0 %v263
  %278 = vmatpush.msra.mxu0 %v57
  %279 = vmatpush.msra.mxu0 %v56
  %280 = vmatpush.msra.mxu0 %v55
  %281 = vmatmul.f32.gmra.mxu0 %v215
  %v282 = vpop.f32.mrf.mxu0
  %v283 = vadd.f32 %v167, %v282
  %284 = vmatmul.f32.gmra.mxu0 %v218
  %v285 = vpop.f32.mrf.mxu0
  %v286 = vadd.f32 %v170, %v285
  %287 = vmatmul.f32.gmra.mxu0 %v221
  %v288 = vpop.f32.mrf.mxu0
  %v289 = vadd.f32 %v173, %v288
  %290 = vmatmul.f32.gmra.mxu0 %v224
  %v291 = vpop.f32.mrf.mxu0
  %v292 = vadd.f32 %v176, %v291
  %293 = vmatmul.f32.gmra.mxu0 %v227
  %v294 = vpop.f32.mrf.mxu0
  %v295 = vadd.f32 %v179, %v294
  %296 = vmatmul.f32.gmra.mxu0 %v230
  %v297 = vpop.f32.mrf.mxu0
  %v298 = vadd.f32 %v182, %v297
  %299 = vmatmul.f32.gmra.mxu0 %v233
  %v300 = vpop.f32.mrf.mxu0
  %v301 = vadd.f32 %v185, %v300
  %302 = vmatmul.f32.gmra.mxu0 %v236
  %v303 = vpop.f32.mrf.mxu0
  %v304 = vadd.f32 %v188, %v303
  %305 = vmatmul.f32.gmra.mxu0 %v239
  %v306 = vpop.f32.mrf.mxu0
  %v307 = vadd.f32 %v191, %v306
  %308 = vmatmul.f32.gmra.mxu0 %v242
  %v309 = vpop.f32.mrf.mxu0
  %v310 = vadd.f32 %v194, %v309
  %311 = vmatmul.f32.gmra.mxu0 %v245
  %v312 = vpop.f32.mrf.mxu0
  %v313 = vadd.f32 %v197, %v312
  %314 = vmatmul.f32.gmra.mxu0 %v248
  %v315 = vpop.f32.mrf.mxu0
  %v316 = vadd.f32 %v200, %v315
  %317 = vmatmul.f32.gmra.mxu0 %v251
  %v318 = vpop.f32.mrf.mxu0
  %v319 = vadd.f32 %v203, %v318
  %320 = vmatmul.f32.gmra.mxu0 %v254
  %v321 = vpop.f32.mrf.mxu0
  %v322 = vadd.f32 %v206, %v321
  %323 = vmatmul.f32.gmra.mxu0 %v257
  %v324 = vpop.f32.mrf.mxu0
  %v325 = vadd.f32 %v209, %v324
  %326 = vmatmul.f32.gmra.mxu0 %v260
  %v327 = vpop.f32.mrf.mxu0
  %v328 = vadd.f32 %v212, %v327
  %329 = vdwg.mxu0
  %s330 = scalar_lea.vmem %s0, 9
  %v331 = vld [vmem:[%s330] ss:$2 sm:$0xff]
  %s332 = scalar_lea.vmem %s0, 25
  %v333 = vld [vmem:[%s332] ss:$2 sm:$0xff]
  %s334 = scalar_lea.vmem %s0, 41
  %v335 = vld [vmem:[%s334] ss:$2 sm:$0xff]
  %s336 = scalar_lea.vmem %s0, 57
  %v337 = vld [vmem:[%s336] ss:$2 sm:$0xff]
  %s338 = scalar_lea.vmem %s0, 73
  %v339 = vld [vmem:[%s338] ss:$2 sm:$0xff]
  %s340 = scalar_lea.vmem %s0, 89
  %v341 = vld [vmem:[%s340] ss:$2 sm:$0xff]
  %s342 = scalar_lea.vmem %s0, 105
  %v343 = vld [vmem:[%s342] ss:$2 sm:$0xff]
  %s344 = scalar_lea.vmem %s0, 121
  %v345 = vld [vmem:[%s344] ss:$2 sm:$0xff]
  %s346 = scalar_lea.vmem %s0, 137
  %v347 = vld [vmem:[%s346] ss:$2 sm:$0xff]
  %s348 = scalar_lea.vmem %s0, 153
  %v349 = vld [vmem:[%s348] ss:$2 sm:$0xff]
  %s350 = scalar_lea.vmem %s0, 169
  %v351 = vld [vmem:[%s350] ss:$2 sm:$0xff]
  %s352 = scalar_lea.vmem %s0, 185
  %v353 = vld [vmem:[%s352] ss:$2 sm:$0xff]
  %s354 = scalar_lea.vmem %s0, 201
  %v355 = vld [vmem:[%s354] ss:$2 sm:$0xff]
  %s356 = scalar_lea.vmem %s0, 217
  %v357 = vld [vmem:[%s356] ss:$2 sm:$0xff]
  %s358 = scalar_lea.vmem %s0, 233
  %v359 = vld [vmem:[%s358] ss:$2 sm:$0xff]
  %s360 = scalar_lea.vmem %s0, 249
  %v361 = vld [vmem:[%s360] ss:$2 sm:$0xff]
  %s362 = scalar_lea.vmem %s1, 64
  %v363 = vld [vmem:[%s362] sm:$0xff]
  %v364 = vld [vmem:[%s362 + $0x8] sm:$0xff]
  %v365 = vld [vmem:[%s362 + $0x10] sm:$0xff]
  %v366 = vld [vmem:[%s362 + $0x18] sm:$0xf]
  %v368 = vsel %vm96, %v331, 0
  %v371 = vsel %vm96, %v333, 0
  %v374 = vsel %vm96, %v335, 0
  %v377 = vsel %vm96, %v337, 0
  %v380 = vsel %vm96, %v339, 0
  %v383 = vsel %vm96, %v341, 0
  %v386 = vsel %vm96, %v343, 0
  %v389 = vsel %vm96, %v345, 0
  %v392 = vsel %vm96, %v347, 0
  %v395 = vsel %vm96, %v349, 0
  %v398 = vsel %vm96, %v351, 0
  %v401 = vsel %vm96, %v353, 0
  %v404 = vsel %vm96, %v355, 0
  %v407 = vsel %vm96, %v357, 0
  %v410 = vsel %vm96, %v359, 0
  %v413 = vsel %vm96, %v361, 0
  %v416 = vsel %vm145, %v366, 0
  %418 = vmatpush.msra.mxu0 0.0
  %419 = vmatpush.msra.mxu0 0.0
  %420 = vmatpush.msra.mxu0 0.0
  %421 = vmatpush.msra.mxu0 0.0
  %422 = vmatpush.msra.mxu0 0.0
  %423 = vmatpush.msra.mxu0 0.0
  %424 = vmatpush.msra.mxu0 0.0
  %425 = vmatpush.msra.mxu0 0.0
  %426 = vmatpush.msra.mxu0 0.0
  %427 = vmatpush.msra.mxu0 0.0
  %428 = vmatpush.msra.mxu0 0.0
  %429 = vmatpush.msra.mxu0 0.0
  %430 = vmatpush.msra.mxu0 %v416
  %431 = vmatpush.msra.mxu0 %v365
  %432 = vmatpush.msra.mxu0 %v364
  %433 = vmatpush.msra.mxu0 %v363
  %434 = vmatmul.f32.gmra.mxu0 %v368
  %v435 = vpop.f32.mrf.mxu0
  %v436 = vadd.f32 0.0, %v435
  %437 = vmatmul.f32.gmra.mxu0 %v371
  %v438 = vpop.f32.mrf.mxu0
  %v439 = vadd.f32 0.0, %v438
  %440 = vmatmul.f32.gmra.mxu0 %v374
  %v441 = vpop.f32.mrf.mxu0
  %v442 = vadd.f32 0.0, %v441
  %443 = vmatmul.f32.gmra.mxu0 %v377
  %v444 = vpop.f32.mrf.mxu0
  %v445 = vadd.f32 0.0, %v444
  %446 = vmatmul.f32.gmra.mxu0 %v380
  %v447 = vpop.f32.mrf.mxu0
  %v448 = vadd.f32 0.0, %v447
  %449 = vmatmul.f32.gmra.mxu0 %v383
  %v450 = vpop.f32.mrf.mxu0
  %v451 = vadd.f32 0.0, %v450
  %452 = vmatmul.f32.gmra.mxu0 %v386
  %v453 = vpop.f32.mrf.mxu0
  %v454 = vadd.f32 0.0, %v453
  %455 = vmatmul.f32.gmra.mxu0 %v389
  %v456 = vpop.f32.mrf.mxu0
  %v457 = vadd.f32 0.0, %v456
  %458 = vmatmul.f32.gmra.mxu0 %v392
  %v459 = vpop.f32.mrf.mxu0
  %v460 = vadd.f32 0.0, %v459
  %461 = vmatmul.f32.gmra.mxu0 %v395
  %v462 = vpop.f32.mrf.mxu0
  %v463 = vadd.f32 0.0, %v462
  %464 = vmatmul.f32.gmra.mxu0 %v398
  %v465 = vpop.f32.mrf.mxu0
  %v466 = vadd.f32 0.0, %v465
  %467 = vmatmul.f32.gmra.mxu0 %v401
  %v468 = vpop.f32.mrf.mxu0
  %v469 = vadd.f32 0.0, %v468
  %470 = vmatmul.f32.gmra.mxu0 %v404
  %v471 = vpop.f32.mrf.mxu0
  %v472 = vadd.f32 0.0, %v471
  %473 = vmatmul.f32.gmra.mxu0 %v407
  %v474 = vpop.f32.mrf.mxu0
  %v475 = vadd.f32 0.0, %v474
  %476 = vmatmul.f32.gmra.mxu0 %v410
  %v477 = vpop.f32.mrf.mxu0
  %v478 = vadd.f32 0.0, %v477
  %479 = vmatmul.f32.gmra.mxu0 %v413
  %v480 = vpop.f32.mrf.mxu0
  %v481 = vadd.f32 0.0, %v480
  %482 = vdwg.mxu0
  %v483 = vadd.f32 %v283, %v436
  %v484 = vadd.f32 %v286, %v439
  %v485 = vadd.f32 %v289, %v442
  %v486 = vadd.f32 %v292, %v445
  %v487 = vadd.f32 %v295, %v448
  %v488 = vadd.f32 %v298, %v451
  %v489 = vadd.f32 %v301, %v454
  %v490 = vadd.f32 %v304, %v457
  %v491 = vadd.f32 %v307, %v460
  %v492 = vadd.f32 %v310, %v463
  %v493 = vadd.f32 %v313, %v466
  %v494 = vadd.f32 %v316, %v469
  %v495 = vadd.f32 %v319, %v472
  %v496 = vadd.f32 %v322, %v475
  %v497 = vadd.f32 %v325, %v478
  %v498 = vadd.f32 %v328, %v481
  %v499 = vld [vmem:[%s5] sm:$0x1]
  %v500 = vperm.slane %v499, 0
  %v501 = vadd.f32 %v483, %v500
  %v502 = vadd.f32 %v484, %v500
  %v503 = vadd.f32 %v485, %v500
  %v504 = vadd.f32 %v486, %v500
  %v505 = vadd.f32 %v487, %v500
  %v506 = vadd.f32 %v488, %v500
  %v507 = vadd.f32 %v489, %v500
  %v508 = vadd.f32 %v490, %v500
  %v509 = vadd.f32 %v491, %v500
  %v510 = vadd.f32 %v492, %v500
  %v511 = vadd.f32 %v493, %v500
  %v512 = vadd.f32 %v494, %v500
  %v513 = vadd.f32 %v495, %v500
  %v514 = vadd.f32 %v496, %v500
  %v515 = vadd.f32 %v497, %v500
  %v516 = vadd.f32 %v498, %v500
  %v517 = vmax.f32 %v501, 0.0
  %v518 = vmax.f32 %v502, 0.0
  %v519 = vmax.f32 %v503, 0.0
  %v520 = vmax.f32 %v504, 0.0
  %v521 = vmax.f32 %v505, 0.0
  %v522 = vmax.f32 %v506, 0.0
  %v523 = vmax.f32 %v507, 0.0
  %v524 = vmax.f32 %v508, 0.0
  %v525 = vmax.f32 %v509, 0.0
  %v526 = vmax.f32 %v510, 0.0
  %v527 = vmax.f32 %v511, 0.0
  %v528 = vmax.f32 %v512, 0.0
  %v529 = vmax.f32 %v513, 0.0
  %v530 = vmax.f32 %v514, 0.0
  %v531 = vmax.f32 %v515, 0.0
  %v532 = vmax.f32 %v516, 0.0
  %v533 = vlaneseq
  %v534 = vshrl.u32 %v533, 7
  %v535 = vadd.s32 %v534, 8
  %v536 = vadd.s32 %v534, 16
  %v537 = vadd.s32 %v534, 24
  %v538 = vadd.s32 %v534, 32
  %v539 = vadd.s32 %v534, 40
  %v540 = vadd.s32 %v534, 48
  %v541 = vadd.s32 %v534, 56
  %v542 = vadd.s32 %v534, 64
  %v543 = vadd.s32 %v534, 72
  %v544 = vadd.s32 %v534, 80
  %v545 = vadd.s32 %v534, 88
  %v546 = vadd.s32 %v534, 96
  %v547 = vadd.s32 %v534, 104
  %v548 = vadd.s32 %v534, 112
  %v549 = vadd.s32 %v534, 120
  %vm550 = vcmp.lt.s32.totalorder %v534, 0
  %v551 = vsub.s32 0, %v534
  %v552 = vsel %vm550, %v551, %v534
  %v553 = vshrl.u32 %v552, 4
  %v554 = vand.u32 %v552, 15
  %v555 = vsub.s32 0, %v554
  %v556 = vsel %vm550, %v555, %v554
  %vm557 = vcmp.lt.s32.totalorder %v535, 0
  %v558 = vsub.s32 0, %v535
  %v559 = vsel %vm557, %v558, %v535
  %v560 = vshrl.u32 %v559, 4
  %v561 = vand.u32 %v559, 15
  %v562 = vsub.s32 0, %v561
  %v563 = vsel %vm557, %v562, %v561
  %vm564 = vcmp.lt.s32.totalorder %v536, 0
  %v565 = vsub.s32 0, %v536
  %v566 = vsel %vm564, %v565, %v536
  %v567 = vshrl.u32 %v566, 4
  %v568 = vand.u32 %v566, 15
  %v569 = vsub.s32 0, %v568
  %v570 = vsel %vm564, %v569, %v568
  %vm571 = vcmp.lt.s32.totalorder %v537, 0
  %v572 = vsub.s32 0, %v537
  %v573 = vsel %vm571, %v572, %v537
  %v574 = vshrl.u32 %v573, 4
  %v575 = vand.u32 %v573, 15
  %v576 = vsub.s32 0, %v575
  %v577 = vsel %vm571, %v576, %v575
  %vm578 = vcmp.lt.s32.totalorder %v538, 0
  %v579 = vsub.s32 0, %v538
  %v580 = vsel %vm578, %v579, %v538
  %v581 = vshrl.u32 %v580, 4
  %v582 = vand.u32 %v580, 15
  %v583 = vsub.s32 0, %v582
  %v584 = vsel %vm578, %v583, %v582
  %vm585 = vcmp.lt.s32.totalorder %v539, 0
  %v586 = vsub.s32 0, %v539
  %v587 = vsel %vm585, %v586, %v539
  %v588 = vshrl.u32 %v587, 4
  %v589 = vand.u32 %v587, 15
  %v590 = vsub.s32 0, %v589
  %v591 = vsel %vm585, %v590, %v589
  %vm592 = vcmp.lt.s32.totalorder %v540, 0
  %v593 = vsub.s32 0, %v540
  %v594 = vsel %vm592, %v593, %v540
  %v595 = vshrl.u32 %v594, 4
  %v596 = vand.u32 %v594, 15
  %v597 = vsub.s32 0, %v596
  %v598 = vsel %vm592, %v597, %v596
  %vm599 = vcmp.lt.s32.totalorder %v541, 0
  %v600 = vsub.s32 0, %v541
  %v601 = vsel %vm599, %v600, %v541
  %v602 = vshrl.u32 %v601, 4
  %v603 = vand.u32 %v601, 15
  %v604 = vsub.s32 0, %v603
  %v605 = vsel %vm599, %v604, %v603
  %vm606 = vcmp.lt.s32.totalorder %v542, 0
  %v607 = vsub.s32 0, %v542
  %v608 = vsel %vm606, %v607, %v542
  %v609 = vshrl.u32 %v608, 4
  %v610 = vand.u32 %v608, 15
  %v611 = vsub.s32 0, %v610
  %v612 = vsel %vm606, %v611, %v610
  %vm613 = vcmp.lt.s32.totalorder %v543, 0
  %v614 = vsub.s32 0, %v543
  %v615 = vsel %vm613, %v614, %v543
  %v616 = vshrl.u32 %v615, 4
  %v617 = vand.u32 %v615, 15
  %v618 = vsub.s32 0, %v617
  %v619 = vsel %vm613, %v618, %v617
  %vm620 = vcmp.lt.s32.totalorder %v544, 0
  %v621 = vsub.s32 0, %v544
  %v622 = vsel %vm620, %v621, %v544
  %v623 = vshrl.u32 %v622, 4
  %v624 = vand.u32 %v622, 15
  %v625 = vsub.s32 0, %v624
  %v626 = vsel %vm620, %v625, %v624
  %vm627 = vcmp.lt.s32.totalorder %v545, 0
  %v628 = vsub.s32 0, %v545
  %v629 = vsel %vm627, %v628, %v545
  %v630 = vshrl.u32 %v629, 4
  %v631 = vand.u32 %v629, 15
  %v632 = vsub.s32 0, %v631
  %v633 = vsel %vm627, %v632, %v631
  %vm634 = vcmp.lt.s32.totalorder %v546, 0
  %v635 = vsub.s32 0, %v546
  %v636 = vsel %vm634, %v635, %v546
  %v637 = vshrl.u32 %v636, 4
  %v638 = vand.u32 %v636, 15
  %v639 = vsub.s32 0, %v638
  %v640 = vsel %vm634, %v639, %v638
  %vm641 = vcmp.lt.s32.totalorder %v547, 0
  %v642 = vsub.s32 0, %v547
  %v643 = vsel %vm641, %v642, %v547
  %v644 = vshrl.u32 %v643, 4
  %v645 = vand.u32 %v643, 15
  %v646 = vsub.s32 0, %v645
  %v647 = vsel %vm641, %v646, %v645
  %vm648 = vcmp.lt.s32.totalorder %v548, 0
  %v649 = vsub.s32 0, %v548
  %v650 = vsel %vm648, %v649, %v548
  %v651 = vshrl.u32 %v650, 4
  %v652 = vand.u32 %v650, 15
  %v653 = vsub.s32 0, %v652
  %v654 = vsel %vm648, %v653, %v652
  %vm655 = vcmp.lt.s32.totalorder %v549, 0
  %v656 = vsub.s32 0, %v549
  %v657 = vsel %vm655, %v656, %v549
  %v658 = vshrl.u32 %v657, 4
  %v659 = vand.u32 %v657, 15
  %v660 = vsub.s32 0, %v659
  %v661 = vsel %vm655, %v660, %v659
  %vm662 = vcmp.ne.s32.totalorder %v556, 0
  %vm663 = vcmp.ne.s32.totalorder %v563, 0
  %vm664 = vcmp.ne.s32.totalorder %v570, 0
  %vm665 = vcmp.ne.s32.totalorder %v577, 0
  %vm666 = vcmp.ne.s32.totalorder %v584, 0
  %vm667 = vcmp.ne.s32.totalorder %v591, 0
  %vm668 = vcmp.ne.s32.totalorder %v598, 0
  %vm669 = vcmp.ne.s32.totalorder %v605, 0
  %vm670 = vcmp.ne.s32.totalorder %v612, 0
  %vm671 = vcmp.ne.s32.totalorder %v619, 0
  %vm672 = vcmp.ne.s32.totalorder %v626, 0
  %vm673 = vcmp.ne.s32.totalorder %v633, 0
  %vm674 = vcmp.ne.s32.totalorder %v640, 0
  %vm675 = vcmp.ne.s32.totalorder %v647, 0
  %vm676 = vcmp.ne.s32.totalorder %v654, 0
  %vm677 = vcmp.ne.s32.totalorder %v661, 0
  %vm678 = vcmp.lt.s32.totalorder %v556, 0
  %vm679 = vcmp.lt.s32.totalorder %v563, 0
  %vm680 = vcmp.lt.s32.totalorder %v570, 0
  %vm681 = vcmp.lt.s32.totalorder %v577, 0
  %vm682 = vcmp.lt.s32.totalorder %v584, 0
  %vm683 = vcmp.lt.s32.totalorder %v591, 0
  %vm684 = vcmp.lt.s32.totalorder %v598, 0
  %vm685 = vcmp.lt.s32.totalorder %v605, 0
  %vm686 = vcmp.lt.s32.totalorder %v612, 0
  %vm687 = vcmp.lt.s32.totalorder %v619, 0
  %vm688 = vcmp.lt.s32.totalorder %v626, 0
  %vm689 = vcmp.lt.s32.totalorder %v633, 0
  %vm690 = vcmp.lt.s32.totalorder %v640, 0
  %vm691 = vcmp.lt.s32.totalorder %v647, 0
  %vm692 = vcmp.lt.s32.totalorder %v654, 0
  %vm693 = vcmp.lt.s32.totalorder %v661, 0
  %vm694 = vmand %vm678, %vm662
  %vm695 = vmand %vm679, %vm663
  %vm696 = vmand %vm680, %vm664
  %vm697 = vmand %vm681, %vm665
  %vm698 = vmand %vm682, %vm666
  %vm699 = vmand %vm683, %vm667
  %vm700 = vmand %vm684, %vm668
  %vm701 = vmand %vm685, %vm669
  %vm702 = vmand %vm686, %vm670
  %vm703 = vmand %vm687, %vm671
  %vm704 = vmand %vm688, %vm672
  %vm705 = vmand %vm689, %vm673
  %vm706 = vmand %vm690, %vm674
  %vm707 = vmand %vm691, %vm675
  %vm708 = vmand %vm692, %vm676
  %vm709 = vmand %vm693, %vm677
  %v710 = vadd.s32 %v556, 16
  %v711 = vadd.s32 %v563, 16
  %v712 = vadd.s32 %v570, 16
  %v713 = vadd.s32 %v577, 16
  %v714 = vadd.s32 %v584, 16
  %v715 = vadd.s32 %v591, 16
  %v716 = vadd.s32 %v598, 16
  %v717 = vadd.s32 %v605, 16
  %v718 = vadd.s32 %v612, 16
  %v719 = vadd.s32 %v619, 16
  %v720 = vadd.s32 %v626, 16
  %v721 = vadd.s32 %v633, 16
  %v722 = vadd.s32 %v640, 16
  %v723 = vadd.s32 %v647, 16
  %v724 = vadd.s32 %v654, 16
  %v725 = vadd.s32 %v661, 16
  %v726 = vsel %vm694, %v710, %v556
  %v727 = vsel %vm695, %v711, %v563
  %v728 = vsel %vm696, %v712, %v570
  %v729 = vsel %vm697, %v713, %v577
  %v730 = vsel %vm698, %v714, %v584
  %v731 = vsel %vm699, %v715, %v591
  %v732 = vsel %vm700, %v716, %v598
  %v733 = vsel %vm701, %v717, %v605
  %v734 = vsel %vm702, %v718, %v612
  %v735 = vsel %vm703, %v719, %v619
  %v736 = vsel %vm704, %v720, %v626
  %v737 = vsel %vm705, %v721, %v633
  %v738 = vsel %vm706, %v722, %v640
  %v739 = vsel %vm707, %v723, %v647
  %v740 = vsel %vm708, %v724, %v654
  %v741 = vsel %vm709, %v725, %v661
  %vm742 = vcmp.lt.s32.totalorder %v726, 14
  %vm743 = vcmp.lt.s32.totalorder %v727, 14
  %vm744 = vcmp.lt.s32.totalorder %v728, 14
  %vm745 = vcmp.lt.s32.totalorder %v729, 14
  %vm746 = vcmp.lt.s32.totalorder %v730, 14
  %vm747 = vcmp.lt.s32.totalorder %v731, 14
  %vm748 = vcmp.lt.s32.totalorder %v732, 14
  %vm749 = vcmp.lt.s32.totalorder %v733, 14
  %vm750 = vcmp.lt.s32.totalorder %v734, 14
  %vm751 = vcmp.lt.s32.totalorder %v735, 14
  %vm752 = vcmp.lt.s32.totalorder %v736, 14
  %vm753 = vcmp.lt.s32.totalorder %v737, 14
  %vm754 = vcmp.lt.s32.totalorder %v738, 14
  %vm755 = vcmp.lt.s32.totalorder %v739, 14
  %vm756 = vcmp.lt.s32.totalorder %v740, 14
  %vm757 = vcmp.lt.s32.totalorder %v741, 14
  %v758 = vsel %vm742, %v517, 0.0
  %v759 = vsel %vm743, %v518, 0.0
  %v760 = vsel %vm744, %v519, 0.0
  %v761 = vsel %vm745, %v520, 0.0
  %v762 = vsel %vm746, %v521, 0.0
  %v763 = vsel %vm747, %v522, 0.0
  %v764 = vsel %vm748, %v523, 0.0
  %v765 = vsel %vm749, %v524, 0.0
  %v766 = vsel %vm750, %v525, 0.0
  %v767 = vsel %vm751, %v526, 0.0
  %v768 = vsel %vm752, %v527, 0.0
  %v769 = vsel %vm753, %v528, 0.0
  %v770 = vsel %vm754, %v529, 0.0
  %v771 = vsel %vm755, %v530, 0.0
  %v772 = vsel %vm756, %v531, 0.0
  %v773 = vsel %vm757, %v532, 0.0
  %774 = vst [vmem:[#allocation2] sm:$0xff] 0.0
  %775 = vst [vmem:[#allocation2 + $0x8] sm:$0xff] %v758
  %776 = vst [vmem:[#allocation2 + $0x10] sm:$0xff] %v759
  %777 = vst [vmem:[#allocation2 + $0x18] sm:$0xff] %v760
  %778 = vst [vmem:[#allocation2 + $0x20] sm:$0xff] %v761
  %779 = vst [vmem:[#allocation2 + $0x28] sm:$0xff] %v762
  %780 = vst [vmem:[#allocation2 + $0x30] sm:$0xff] %v763
  %781 = vst [vmem:[#allocation2 + $0x38] sm:$0xff] %v764
  %782 = vst [vmem:[#allocation2 + $0x40] sm:$0xff] %v765
  %783 = vst [vmem:[#allocation2 + $0x48] sm:$0xff] %v766
  %784 = vst [vmem:[#allocation2 + $0x50] sm:$0xff] %v767
  %785 = vst [vmem:[#allocation2 + $0x58] sm:$0xff] %v768
  %786 = vst [vmem:[#allocation2 + $0x60] sm:$0xff] %v769
  %787 = vst [vmem:[#allocation2 + $0x68] sm:$0xff] %v770
  %788 = vst [vmem:[#allocation2 + $0x70] sm:$0xff] %v771
  %789 = vst [vmem:[#allocation2 + $0x78] sm:$0xff] %v772
  %790 = vst [vmem:[#allocation2 + $0x80] sm:$0xff] %v773
  %s791 = scalar_lea.vmem [#allocation2], 7
  %v792 = vld [vmem:[%s791] ss:$2 sm:$0xff]
  %s793 = scalar_lea.vmem [#allocation2], 23
  %v794 = vld [vmem:[%s793] ss:$2 sm:$0xff]
  %s795 = scalar_lea.vmem [#allocation2], 39
  %v796 = vld [vmem:[%s795] ss:$2 sm:$0xff]
  %s797 = scalar_lea.vmem [#allocation2], 55
  %v798 = vld [vmem:[%s797] ss:$2 sm:$0xff]
  %s799 = scalar_lea.vmem [#allocation2], 71
  %v800 = vld [vmem:[%s799] ss:$2 sm:$0xff]
  %s801 = scalar_lea.vmem [#allocation2], 87
  %v802 = vld [vmem:[%s801] ss:$2 sm:$0xff]
  %s803 = scalar_lea.vmem [#allocation2], 103
  %v804 = vld [vmem:[%s803] ss:$2 sm:$0xff]
  %s805 = scalar_lea.vmem [#allocation2], 119
  %v806 = vld [vmem:[%s805] ss:$2 sm:$0xff]
  %v807 = vld [vmem:[%s2] sm:$0xff]
  %v808 = vld [vmem:[%s2 + $0x8] sm:$0xff]
  %v809 = vld [vmem:[%s2 + $0x10] sm:$0xff]
  %v810 = vld [vmem:[%s2 + $0x18] sm:$0xff]
  %v811 = vld [vmem:[%s2 + $0x20] sm:$0xff]
  %v812 = vld [vmem:[%s2 + $0x28] sm:$0xff]
  %v813 = vld [vmem:[%s2 + $0x30] sm:$0xff]
  %v814 = vld [vmem:[%s2 + $0x38] sm:$0xff]
  %v815 = vld [vmem:[%s2 + $0x40] sm:$0xff]
  %v816 = vld [vmem:[%s2 + $0x48] sm:$0xff]
  %v817 = vld [vmem:[%s2 + $0x50] sm:$0xff]
  %v818 = vld [vmem:[%s2 + $0x58] sm:$0xff]
  %v819 = vld [vmem:[%s2 + $0x60] sm:$0xff]
  %v820 = vld [vmem:[%s2 + $0x68] sm:$0xff]
  %v821 = vld [vmem:[%s2 + $0x70] sm:$0xff]
  %v822 = vld [vmem:[%s2 + $0x78] sm:$0xff]
  %s823 = scalar_lea.vmem [#allocation2], 8
  %v824 = vld [vmem:[%s823] ss:$2 sm:$0xff]
  %s825 = scalar_lea.vmem [#allocation2], 24
  %v826 = vld [vmem:[%s825] ss:$2 sm:$0xff]
  %s827 = scalar_lea.vmem [#allocation2], 40
  %v828 = vld [vmem:[%s827] ss:$2 sm:$0xff]
  %s829 = scalar_lea.vmem [#allocation2], 56
  %v830 = vld [vmem:[%s829] ss:$2 sm:$0xff]
  %s831 = scalar_lea.vmem [#allocation2], 72
  %v832 = vld [vmem:[%s831] ss:$2 sm:$0xff]
  %s833 = scalar_lea.vmem [#allocation2], 88
  %v834 = vld [vmem:[%s833] ss:$2 sm:$0xff]
  %s835 = scalar_lea.vmem [#allocation2], 104
  %v836 = vld [vmem:[%s835] ss:$2 sm:$0xff]
  %s837 = scalar_lea.vmem [#allocation2], 120
  %v838 = vld [vmem:[%s837] ss:$2 sm:$0xff]
  %s839 = scalar_lea.vmem %s2, 128
  %v840 = vld [vmem:[%s839] sm:$0xff]
  %v841 = vld [vmem:[%s839 + $0x8] sm:$0xff]
  %v842 = vld [vmem:[%s839 + $0x10] sm:$0xff]
  %v843 = vld [vmem:[%s839 + $0x18] sm:$0xff]
  %v844 = vld [vmem:[%s839 + $0x20] sm:$0xff]
  %v845 = vld [vmem:[%s839 + $0x28] sm:$0xff]
  %v846 = vld [vmem:[%s839 + $0x30] sm:$0xff]
  %v847 = vld [vmem:[%s839 + $0x38] sm:$0xff]
  %v848 = vld [vmem:[%s839 + $0x40] sm:$0xff]
  %v849 = vld [vmem:[%s839 + $0x48] sm:$0xff]
  %v850 = vld [vmem:[%s839 + $0x50] sm:$0xff]
  %v851 = vld [vmem:[%s839 + $0x58] sm:$0xff]
  %v852 = vld [vmem:[%s839 + $0x60] sm:$0xff]
  %v853 = vld [vmem:[%s839 + $0x68] sm:$0xff]
  %v854 = vld [vmem:[%s839 + $0x70] sm:$0xff]
  %v855 = vld [vmem:[%s839 + $0x78] sm:$0xff]
  %856 = vmatpush.msra.mxu0 %v855
  %857 = vmatpush.msra.mxu0 %v854
  %858 = vmatpush.msra.mxu0 %v853
  %859 = vmatpush.msra.mxu0 %v852
  %860 = vmatpush.msra.mxu0 %v851
  %861 = vmatpush.msra.mxu0 %v850
  %862 = vmatpush.msra.mxu0 %v849
  %863 = vmatpush.msra.mxu0 %v848
  %864 = vmatpush.msra.mxu0 %v847
  %865 = vmatpush.msra.mxu0 %v846
  %866 = vmatpush.msra.mxu0 %v845
  %867 = vmatpush.msra.mxu0 %v844
  %868 = vmatpush.msra.mxu0 %v843
  %869 = vmatpush.msra.mxu0 %v842
  %870 = vmatpush.msra.mxu0 %v841
  %871 = vmatpush.msra.mxu0 %v840
  %872 = vmatmul.f32.gmra.mxu0 %v824
  %v873 = vpop.f32.mrf.mxu0
  %v874 = vadd.f32 0.0, %v873
  %875 = vmatmul.f32.gmra.mxu0 %v826
  %v876 = vpop.f32.mrf.mxu0
  %v877 = vadd.f32 0.0, %v876
  %878 = vmatmul.f32.gmra.mxu0 %v828
  %v879 = vpop.f32.mrf.mxu0
  %v880 = vadd.f32 0.0, %v879
  %881 = vmatmul.f32.gmra.mxu0 %v830
  %v882 = vpop.f32.mrf.mxu0
  %v883 = vadd.f32 0.0, %v882
  %884 = vmatmul.f32.gmra.mxu0 %v832
  %v885 = vpop.f32.mrf.mxu0
  %v886 = vadd.f32 0.0, %v885
  %887 = vmatmul.f32.gmra.mxu0 %v834
  %v888 = vpop.f32.mrf.mxu0
  %v889 = vadd.f32 0.0, %v888
  %890 = vmatmul.f32.gmra.mxu0 %v836
  %v891 = vpop.f32.mrf.mxu0
  %v892 = vadd.f32 0.0, %v891
  %893 = vmatmul.f32.gmra.mxu0 %v838
  %v894 = vpop.f32.mrf.mxu0
  %v895 = vadd.f32 0.0, %v894
  %896 = vdwg.mxu0
  %897 = vmatpush.msra.mxu0 %v822
  %898 = vmatpush.msra.mxu0 %v821
  %899 = vmatpush.msra.mxu0 %v820
  %900 = vmatpush.msra.mxu0 %v819
  %901 = vmatpush.msra.mxu0 %v818
  %902 = vmatpush.msra.mxu0 %v817
  %903 = vmatpush.msra.mxu0 %v816
  %904 = vmatpush.msra.mxu0 %v815
  %905 = vmatpush.msra.mxu0 %v814
  %906 = vmatpush.msra.mxu0 %v813
  %907 = vmatpush.msra.mxu0 %v812
  %908 = vmatpush.msra.mxu0 %v811
  %909 = vmatpush.msra.mxu0 %v810
  %910 = vmatpush.msra.mxu0 %v809
  %911 = vmatpush.msra.mxu0 %v808
  %912 = vmatpush.msra.mxu0 %v807
  %913 = vmatmul.f32.gmra.mxu0 %v792
  %v914 = vpop.f32.mrf.mxu0
  %v915 = vadd.f32 %v874, %v914
  %916 = vmatmul.f32.gmra.mxu0 %v794
  %v917 = vpop.f32.mrf.mxu0
  %v918 = vadd.f32 %v877, %v917
  %919 = vmatmul.f32.gmra.mxu0 %v796
  %v920 = vpop.f32.mrf.mxu0
  %v921 = vadd.f32 %v880, %v920
  %922 = vmatmul.f32.gmra.mxu0 %v798
  %v923 = vpop.f32.mrf.mxu0
  %v924 = vadd.f32 %v883, %v923
  %925 = vmatmul.f32.gmra.mxu0 %v800
  %v926 = vpop.f32.mrf.mxu0
  %v927 = vadd.f32 %v886, %v926
  %928 = vmatmul.f32.gmra.mxu0 %v802
  %v929 = vpop.f32.mrf.mxu0
  %v930 = vadd.f32 %v889, %v929
  %931 = vmatmul.f32.gmra.mxu0 %v804
  %v932 = vpop.f32.mrf.mxu0
  %v933 = vadd.f32 %v892, %v932
  %934 = vmatmul.f32.gmra.mxu0 %v806
  %v935 = vpop.f32.mrf.mxu0
  %v936 = vadd.f32 %v895, %v935
  %937 = vdwg.mxu0
  %s938 = scalar_lea.vmem [#allocation2], 9
  %v939 = vld [vmem:[%s938] ss:$2 sm:$0xff]
  %s940 = scalar_lea.vmem [#allocation2], 25
  %v941 = vld [vmem:[%s940] ss:$2 sm:$0xff]
  %s942 = scalar_lea.vmem [#allocation2], 41
  %v943 = vld [vmem:[%s942] ss:$2 sm:$0xff]
  %s944 = scalar_lea.vmem [#allocation2], 57
  %v945 = vld [vmem:[%s944] ss:$2 sm:$0xff]
  %s946 = scalar_lea.vmem [#allocation2], 73
  %v947 = vld [vmem:[%s946] ss:$2 sm:$0xff]
  %s948 = scalar_lea.vmem [#allocation2], 89
  %v949 = vld [vmem:[%s948] ss:$2 sm:$0xff]
  %s950 = scalar_lea.vmem [#allocation2], 105
  %v951 = vld [vmem:[%s950] ss:$2 sm:$0xff]
  %s952 = scalar_lea.vmem [#allocation2], 121
  %v953 = vld [vmem:[%s952] ss:$2 sm:$0xff]
  %s954 = scalar_lea.vmem %s2, 256
  %v955 = vld [vmem:[%s954] sm:$0xff]
  %v956 = vld [vmem:[%s954 + $0x8] sm:$0xff]
  %v957 = vld [vmem:[%s954 + $0x10] sm:$0xff]
  %v958 = vld [vmem:[%s954 + $0x18] sm:$0xff]
  %v959 = vld [vmem:[%s954 + $0x20] sm:$0xff]
  %v960 = vld [vmem:[%s954 + $0x28] sm:$0xff]
  %v961 = vld [vmem:[%s954 + $0x30] sm:$0xff]
  %v962 = vld [vmem:[%s954 + $0x38] sm:$0xff]
  %v963 = vld [vmem:[%s954 + $0x40] sm:$0xff]
  %v964 = vld [vmem:[%s954 + $0x48] sm:$0xff]
  %v965 = vld [vmem:[%s954 + $0x50] sm:$0xff]
  %v966 = vld [vmem:[%s954 + $0x58] sm:$0xff]
  %v967 = vld [vmem:[%s954 + $0x60] sm:$0xff]
  %v968 = vld [vmem:[%s954 + $0x68] sm:$0xff]
  %v969 = vld [vmem:[%s954 + $0x70] sm:$0xff]
  %v970 = vld [vmem:[%s954 + $0x78] sm:$0xff]
  %971 = vmatpush.msra.mxu0 %v970
  %972 = vmatpush.msra.mxu0 %v969
  %973 = vmatpush.msra.mxu0 %v968
  %974 = vmatpush.msra.mxu0 %v967
  %975 = vmatpush.msra.mxu0 %v966
  %976 = vmatpush.msra.mxu0 %v965
  %977 = vmatpush.msra.mxu0 %v964
  %978 = vmatpush.msra.mxu0 %v963
  %979 = vmatpush.msra.mxu0 %v962
  %980 = vmatpush.msra.mxu0 %v961
  %981 = vmatpush.msra.mxu0 %v960
  %982 = vmatpush.msra.mxu0 %v959
  %983 = vmatpush.msra.mxu0 %v958
  %984 = vmatpush.msra.mxu0 %v957
  %985 = vmatpush.msra.mxu0 %v956
  %986 = vmatpush.msra.mxu0 %v955
  %987 = vmatmul.f32.gmra.mxu0 %v939
  %v988 = vpop.f32.mrf.mxu0
  %v989 = vadd.f32 0.0, %v988
  %990 = vmatmul.f32.gmra.mxu0 %v941
  %v991 = vpop.f32.mrf.mxu0
  %v992 = vadd.f32 0.0, %v991
  %993 = vmatmul.f32.gmra.mxu0 %v943
  %v994 = vpop.f32.mrf.mxu0
  %v995 = vadd.f32 0.0, %v994
  %996 = vmatmul.f32.gmra.mxu0 %v945
  %v997 = vpop.f32.mrf.mxu0
  %v998 = vadd.f32 0.0, %v997
  %999 = vmatmul.f32.gmra.mxu0 %v947
  %v1000 = vpop.f32.mrf.mxu0
  %v1001 = vadd.f32 0.0, %v1000
  %1002 = vmatmul.f32.gmra.mxu0 %v949
  %v1003 = vpop.f32.mrf.mxu0
  %v1004 = vadd.f32 0.0, %v1003
  %1005 = vmatmul.f32.gmra.mxu0 %v951
  %v1006 = vpop.f32.mrf.mxu0
  %v1007 = vadd.f32 0.0, %v1006
  %1008 = vmatmul.f32.gmra.mxu0 %v953
  %v1009 = vpop.f32.mrf.mxu0
  %v1010 = vadd.f32 0.0, %v1009
  %1011 = vdwg.mxu0
  %v1012 = vadd.f32 %v915, %v989
  %v1013 = vadd.f32 %v918, %v992
  %v1014 = vadd.f32 %v921, %v995
  %v1015 = vadd.f32 %v924, %v998
  %v1016 = vadd.f32 %v927, %v1001
  %v1017 = vadd.f32 %v930, %v1004
  %v1018 = vadd.f32 %v933, %v1007
  %v1019 = vadd.f32 %v936, %v1010
  %v1020 = vld [vmem:[%s5 + $0x1] sm:$0x1]
  %v1021 = vperm.slane %v1020, 0
  %v1022 = vmul.f32 %v1012, %v1021
  %v1023 = vmul.f32 %v1013, %v1021
  %v1024 = vmul.f32 %v1014, %v1021
  %v1025 = vmul.f32 %v1015, %v1021
  %v1026 = vmul.f32 %v1016, %v1021
  %v1027 = vmul.f32 %v1017, %v1021
  %v1028 = vmul.f32 %v1018, %v1021
  %v1029 = vmul.f32 %v1019, %v1021
  %v1030 = vld [vmem:[%s5 + $0x2] sm:$0x1]
  %v1031 = vperm.slane %v1030, 0
  %v1032 = vadd.f32 %v1022, %v1031
  %v1033 = vadd.f32 %v1023, %v1031
  %v1034 = vadd.f32 %v1024, %v1031
  %v1035 = vadd.f32 %v1025, %v1031
  %v1036 = vadd.f32 %v1026, %v1031
  %v1037 = vadd.f32 %v1027, %v1031
  %v1038 = vadd.f32 %v1028, %v1031
  %v1039 = vadd.f32 %v1029, %v1031
  %v1040 = vmax.f32 %v1032, 0.0
  %v1041 = vmax.f32 %v1033, 0.0
  %v1042 = vmax.f32 %v1034, 0.0
  %v1043 = vmax.f32 %v1035, 0.0
  %v1044 = vmax.f32 %v1036, 0.0
  %v1045 = vmax.f32 %v1037, 0.0
  %v1046 = vmax.f32 %v1038, 0.0
  %v1047 = vmax.f32 %v1039, 0.0
  %1048 = vst [vmem:[#allocation3] sm:$0xff] %v1040
  %1049 = vst [vmem:[#allocation3 + $0x8] sm:$0xff] %v1041
  %1050 = vst [vmem:[#allocation3 + $0x10] sm:$0xff] %v1042
  %1051 = vst [vmem:[#allocation3 + $0x18] sm:$0xff] %v1043
  %1052 = vst [vmem:[#allocation3 + $0x20] sm:$0xff] %v1044
  %1053 = vst [vmem:[#allocation3 + $0x28] sm:$0xff] %v1045
  %1054 = vst [vmem:[#allocation3 + $0x30] sm:$0xff] %v1046
  %1055 = vst [vmem:[#allocation3 + $0x38] sm:$0xff] %v1047
  %1056 = vst [vmem:[#allocation3 + $0x40] sm:$0xff] 0.0
  %v1057 = vld [vmem:[#allocation3] ss:$2 sm:$0xff]
  %s1058 = scalar_lea.vmem [#allocation3], 16
  %v1059 = vld [vmem:[%s1058] ss:$2 sm:$0xff]
  %s1060 = scalar_lea.vmem [#allocation3], 32
  %v1061 = vld [vmem:[%s1060] ss:$2 sm:$0xff]
  %s1062 = scalar_lea.vmem [#allocation3], 48
  %v1063 = vld [vmem:[%s1062] ss:$2 sm:$0xff]
  %s1064 = scalar_lea.vmem %s2, 384
  %v1065 = vld [vmem:[%s1064] sm:$0xff]
  %v1066 = vld [vmem:[%s1064 + $0x8] sm:$0xff]
  %v1067 = vld [vmem:[%s1064 + $0x10] sm:$0xff]
  %v1068 = vld [vmem:[%s1064 + $0x18] sm:$0xff]
  %v1069 = vld [vmem:[%s1064 + $0x20] sm:$0xff]
  %v1070 = vld [vmem:[%s1064 + $0x28] sm:$0xff]
  %v1071 = vld [vmem:[%s1064 + $0x30] sm:$0xff]
  %v1072 = vld [vmem:[%s1064 + $0x38] sm:$0xff]
  %v1073 = vld [vmem:[%s1064 + $0x40] sm:$0xff]
  %v1074 = vld [vmem:[%s1064 + $0x48] sm:$0xff]
  %v1075 = vld [vmem:[%s1064 + $0x50] sm:$0xff]
  %v1076 = vld [vmem:[%s1064 + $0x58] sm:$0xff]
  %v1077 = vld [vmem:[%s1064 + $0x60] sm:$0xff]
  %v1078 = vld [vmem:[%s1064 + $0x68] sm:$0xff]
  %v1079 = vld [vmem:[%s1064 + $0x70] sm:$0xff]
  %v1080 = vld [vmem:[%s1064 + $0x78] sm:$0xff]
  %s1081 = scalar_lea.vmem [#allocation3], 1
  %v1082 = vld [vmem:[%s1081] ss:$2 sm:$0xff]
  %s1083 = scalar_lea.vmem [#allocation3], 17
  %v1084 = vld [vmem:[%s1083] ss:$2 sm:$0xff]
  %s1085 = scalar_lea.vmem [#allocation3], 33
  %v1086 = vld [vmem:[%s1085] ss:$2 sm:$0xff]
  %s1087 = scalar_lea.vmem [#allocation3], 49
  %v1088 = vld [vmem:[%s1087] ss:$2 sm:$0xff]
  %s1089 = scalar_lea.vmem %s2, 512
  %v1090 = vld [vmem:[%s1089] sm:$0xff]
  %v1091 = vld [vmem:[%s1089 + $0x8] sm:$0xff]
  %v1092 = vld [vmem:[%s1089 + $0x10] sm:$0xff]
  %v1093 = vld [vmem:[%s1089 + $0x18] sm:$0xff]
  %v1094 = vld [vmem:[%s1089 + $0x20] sm:$0xff]
  %v1095 = vld [vmem:[%s1089 + $0x28] sm:$0xff]
  %v1096 = vld [vmem:[%s1089 + $0x30] sm:$0xff]
  %v1097 = vld [vmem:[%s1089 + $0x38] sm:$0xff]
  %v1098 = vld [vmem:[%s1089 + $0x40] sm:$0xff]
  %v1099 = vld [vmem:[%s1089 + $0x48] sm:$0xff]
  %v1100 = vld [vmem:[%s1089 + $0x50] sm:$0xff]
  %v1101 = vld [vmem:[%s1089 + $0x58] sm:$0xff]
  %v1102 = vld [vmem:[%s1089 + $0x60] sm:$0xff]
  %v1103 = vld [vmem:[%s1089 + $0x68] sm:$0xff]
  %v1104 = vld [vmem:[%s1089 + $0x70] sm:$0xff]
  %v1105 = vld [vmem:[%s1089 + $0x78] sm:$0xff]
  %1106 = vmatpush.msra.mxu0 %v1105
  %1107 = vmatpush.msra.mxu0 %v1104
  %1108 = vmatpush.msra.mxu0 %v1103
  %1109 = vmatpush.msra.mxu0 %v1102
  %1110 = vmatpush.msra.mxu0 %v1101
  %1111 = vmatpush.msra.mxu0 %v1100
  %1112 = vmatpush.msra.mxu0 %v1099
  %1113 = vmatpush.msra.mxu0 %v1098
  %1114 = vmatpush.msra.mxu0 %v1097
  %1115 = vmatpush.msra.mxu0 %v1096
  %1116 = vmatpush.msra.mxu0 %v1095
  %1117 = vmatpush.msra.mxu0 %v1094
  %1118 = vmatpush.msra.mxu0 %v1093
  %1119 = vmatpush.msra.mxu0 %v1092
  %1120 = vmatpush.msra.mxu0 %v1091
  %1121 = vmatpush.msra.mxu0 %v1090
  %1122 = vmatmul.f32.gmra.mxu0 %v1082
  %v1123 = vpop.f32.mrf.mxu0
  %v1124 = vadd.f32 0.0, %v1123
  %1125 = vmatmul.f32.gmra.mxu0 %v1084
  %v1126 = vpop.f32.mrf.mxu0
  %v1127 = vadd.f32 0.0, %v1126
  %1128 = vmatmul.f32.gmra.mxu0 %v1086
  %v1129 = vpop.f32.mrf.mxu0
  %v1130 = vadd.f32 0.0, %v1129
  %1131 = vmatmul.f32.gmra.mxu0 %v1088
  %v1132 = vpop.f32.mrf.mxu0
  %v1133 = vadd.f32 0.0, %v1132
  %1134 = vdwg.mxu0
  %1135 = vmatpush.msra.mxu0 %v1080
  %1136 = vmatpush.msra.mxu0 %v1079
  %1137 = vmatpush.msra.mxu0 %v1078
  %1138 = vmatpush.msra.mxu0 %v1077
  %1139 = vmatpush.msra.mxu0 %v1076
  %1140 = vmatpush.msra.mxu0 %v1075
  %1141 = vmatpush.msra.mxu0 %v1074
  %1142 = vmatpush.msra.mxu0 %v1073
  %1143 = vmatpush.msra.mxu0 %v1072
  %1144 = vmatpush.msra.mxu0 %v1071
  %1145 = vmatpush.msra.mxu0 %v1070
  %1146 = vmatpush.msra.mxu0 %v1069
  %1147 = vmatpush.msra.mxu0 %v1068
  %1148 = vmatpush.msra.mxu0 %v1067
  %1149 = vmatpush.msra.mxu0 %v1066
  %1150 = vmatpush.msra.mxu0 %v1065
  %1151 = vmatmul.f32.gmra.mxu0 %v1057
  %v1152 = vpop.f32.mrf.mxu0
  %v1153 = vadd.f32 %v1124, %v1152
  %1154 = vmatmul.f32.gmra.mxu0 %v1059
  %v1155 = vpop.f32.mrf.mxu0
  %v1156 = vadd.f32 %v1127, %v1155
  %1157 = vmatmul.f32.gmra.mxu0 %v1061
  %v1158 = vpop.f32.mrf.mxu0
  %v1159 = vadd.f32 %v1130, %v1158
  %1160 = vmatmul.f32.gmra.mxu0 %v1063
  %v1161 = vpop.f32.mrf.mxu0
  %v1162 = vadd.f32 %v1133, %v1161
  %1163 = vdwg.mxu0
  %s1164 = scalar_lea.vmem [#allocation3], 2
  %v1165 = vld [vmem:[%s1164] ss:$2 sm:$0xff]
  %s1166 = scalar_lea.vmem [#allocation3], 18
  %v1167 = vld [vmem:[%s1166] ss:$2 sm:$0xff]
  %s1168 = scalar_lea.vmem [#allocation3], 34
  %v1169 = vld [vmem:[%s1168] ss:$2 sm:$0xff]
  %s1170 = scalar_lea.vmem [#allocation3], 50
  %v1171 = vld [vmem:[%s1170] ss:$2 sm:$0xff]
  %s1172 = scalar_lea.vmem %s2, 640
  %v1173 = vld [vmem:[%s1172] sm:$0xff]
  %v1174 = vld [vmem:[%s1172 + $0x8] sm:$0xff]
  %v1175 = vld [vmem:[%s1172 + $0x10] sm:$0xff]
  %v1176 = vld [vmem:[%s1172 + $0x18] sm:$0xff]
  %v1177 = vld [vmem:[%s1172 + $0x20] sm:$0xff]
  %v1178 = vld [vmem:[%s1172 + $0x28] sm:$0xff]
  %v1179 = vld [vmem:[%s1172 + $0x30] sm:$0xff]
  %v1180 = vld [vmem:[%s1172 + $0x38] sm:$0xff]
  %v1181 = vld [vmem:[%s1172 + $0x40] sm:$0xff]
  %v1182 = vld [vmem:[%s1172 + $0x48] sm:$0xff]
  %v1183 = vld [vmem:[%s1172 + $0x50] sm:$0xff]
  %v1184 = vld [vmem:[%s1172 + $0x58] sm:$0xff]
  %v1185 = vld [vmem:[%s1172 + $0x60] sm:$0xff]
  %v1186 = vld [vmem:[%s1172 + $0x68] sm:$0xff]
  %v1187 = vld [vmem:[%s1172 + $0x70] sm:$0xff]
  %v1188 = vld [vmem:[%s1172 + $0x78] sm:$0xff]
  %1189 = vmatpush.msra.mxu0 %v1188
  %1190 = vmatpush.msra.mxu0 %v1187
  %1191 = vmatpush.msra.mxu0 %v1186
  %1192 = vmatpush.msra.mxu0 %v1185
  %1193 = vmatpush.msra.mxu0 %v1184
  %1194 = vmatpush.msra.mxu0 %v1183
  %1195 = vmatpush.msra.mxu0 %v1182
  %1196 = vmatpush.msra.mxu0 %v1181
  %1197 = vmatpush.msra.mxu0 %v1180
  %1198 = vmatpush.msra.mxu0 %v1179
  %1199 = vmatpush.msra.mxu0 %v1178
  %1200 = vmatpush.msra.mxu0 %v1177
  %1201 = vmatpush.msra.mxu0 %v1176
  %1202 = vmatpush.msra.mxu0 %v1175
  %1203 = vmatpush.msra.mxu0 %v1174
  %1204 = vmatpush.msra.mxu0 %v1173
  %1205 = vmatmul.f32.gmra.mxu0 %v1165
  %v1206 = vpop.f32.mrf.mxu0
  %v1207 = vadd.f32 0.0, %v1206
  %1208 = vmatmul.f32.gmra.mxu0 %v1167
  %v1209 = vpop.f32.mrf.mxu0
  %v1210 = vadd.f32 0.0, %v1209
  %1211 = vmatmul.f32.gmra.mxu0 %v1169
  %v1212 = vpop.f32.mrf.mxu0
  %v1213 = vadd.f32 0.0, %v1212
  %1214 = vmatmul.f32.gmra.mxu0 %v1171
  %v1215 = vpop.f32.mrf.mxu0
  %v1216 = vadd.f32 0.0, %v1215
  %1217 = vdwg.mxu0
  %v1218 = vadd.f32 %v1153, %v1207
  %v1219 = vadd.f32 %v1156, %v1210
  %v1220 = vadd.f32 %v1159, %v1213
  %v1221 = vadd.f32 %v1162, %v1216
  %v1222 = vld [vmem:[%s5 + $0x3] sm:$0x1]
  %v1223 = vperm.slane %v1222, 0
  %v1224 = vadd.f32 %v1218, %v1223
  %v1225 = vadd.f32 %v1219, %v1223
  %v1226 = vadd.f32 %v1220, %v1223
  %v1227 = vadd.f32 %v1221, %v1223
  %v1228 = vmax.f32 %v1224, 0.0
  %v1229 = vmax.f32 %v1225, 0.0
  %v1230 = vmax.f32 %v1226, 0.0
  %v1231 = vmax.f32 %v1227, 0.0
  %1232 = vst [vmem:[#allocation4] sm:$0xff] %v1228
  %1233 = vst [vmem:[#allocation4 + $0x8] sm:$0xff] %v1229
  %1234 = vst [vmem:[#allocation4 + $0x10] sm:$0xff] %v1230
  %1235 = vst [vmem:[#allocation4 + $0x18] sm:$0xff] %v1231
  %v1236 = vld [vmem:[#allocation4] ss:$4 sm:$0xff]
  %s1237 = scalar_lea.vmem %s2, 768
  %v1238 = vld [vmem:[%s1237] sm:$0xff]
  %v1239 = vld [vmem:[%s1237 + $0x8] sm:$0xff]
  %v1240 = vld [vmem:[%s1237 + $0x10] sm:$0xff]
  %v1241 = vld [vmem:[%s1237 + $0x18] sm:$0xff]
  %v1242 = vld [vmem:[%s1237 + $0x20] sm:$0xff]
  %v1243 = vld [vmem:[%s1237 + $0x28] sm:$0xff]
  %v1244 = vld [vmem:[%s1237 + $0x30] sm:$0xff]
  %v1245 = vld [vmem:[%s1237 + $0x38] sm:$0xff]
  %v1246 = vld [vmem:[%s1237 + $0x40] sm:$0xff]
  %v1247 = vld [vmem:[%s1237 + $0x48] sm:$0xff]
  %v1248 = vld [vmem:[%s1237 + $0x50] sm:$0xff]
  %v1249 = vld [vmem:[%s1237 + $0x58] sm:$0xff]
  %v1250 = vld [vmem:[%s1237 + $0x60] sm:$0xff]
  %v1251 = vld [vmem:[%s1237 + $0x68] sm:$0xff]
  %v1252 = vld [vmem:[%s1237 + $0x70] sm:$0xff]
  %v1253 = vld [vmem:[%s1237 + $0x78] sm:$0xff]
  %s1254 = scalar_lea.vmem [#allocation4], 1
  %v1255 = vld [vmem:[%s1254] ss:$4 sm:$0xff]
  %s1256 = scalar_lea.vmem %s2, 896
  %v1257 = vld [vmem:[%s1256] sm:$0xff]
  %v1258 = vld [vmem:[%s1256 + $0x8] sm:$0xff]
  %v1259 = vld [vmem:[%s1256 + $0x10] sm:$0xff]
  %v1260 = vld [vmem:[%s1256 + $0x18] sm:$0xff]
  %v1261 = vld [vmem:[%s1256 + $0x20] sm:$0xff]
  %v1262 = vld [vmem:[%s1256 + $0x28] sm:$0xff]
  %v1263 = vld [vmem:[%s1256 + $0x30] sm:$0xff]
  %v1264 = vld [vmem:[%s1256 + $0x38] sm:$0xff]
  %v1265 = vld [vmem:[%s1256 + $0x40] sm:$0xff]
  %v1266 = vld [vmem:[%s1256 + $0x48] sm:$0xff]
  %v1267 = vld [vmem:[%s1256 + $0x50] sm:$0xff]
  %v1268 = vld [vmem:[%s1256 + $0x58] sm:$0xff]
  %v1269 = vld [vmem:[%s1256 + $0x60] sm:$0xff]
  %v1270 = vld [vmem:[%s1256 + $0x68] sm:$0xff]
  %v1271 = vld [vmem:[%s1256 + $0x70] sm:$0xff]
  %v1272 = vld [vmem:[%s1256 + $0x78] sm:$0xff]
  %1273 = vmatpush.msra.mxu0 %v1272
  %1274 = vmatpush.msra.mxu0 %v1271
  %1275 = vmatpush.msra.mxu0 %v1270
  %1276 = vmatpush.msra.mxu0 %v1269
  %1277 = vmatpush.msra.mxu0 %v1268
  %1278 = vmatpush.msra.mxu0 %v1267
  %1279 = vmatpush.msra.mxu0 %v1266
  %1280 = vmatpush.msra.mxu0 %v1265
  %1281 = vmatpush.msra.mxu0 %v1264
  %1282 = vmatpush.msra.mxu0 %v1263
  %1283 = vmatpush.msra.mxu0 %v1262
  %1284 = vmatpush.msra.mxu0 %v1261
  %1285 = vmatpush.msra.mxu0 %v1260
  %1286 = vmatpush.msra.mxu0 %v1259
  %1287 = vmatpush.msra.mxu0 %v1258
  %1288 = vmatpush.msra.mxu0 %v1257
  %1289 = vmatmul.f32.gmra.mxu0 %v1255
  %v1290 = vpop.f32.mrf.mxu0
  %v1291 = vadd.f32 0.0, %v1290
  %1292 = vdwg.mxu0
  %1293 = vmatpush.msra.mxu0 %v1253
  %1294 = vmatpush.msra.mxu0 %v1252
  %1295 = vmatpush.msra.mxu0 %v1251
  %1296 = vmatpush.msra.mxu0 %v1250
  %1297 = vmatpush.msra.mxu0 %v1249
  %1298 = vmatpush.msra.mxu0 %v1248
  %1299 = vmatpush.msra.mxu0 %v1247
  %1300 = vmatpush.msra.mxu0 %v1246
  %1301 = vmatpush.msra.mxu0 %v1245
  %1302 = vmatpush.msra.mxu0 %v1244
  %1303 = vmatpush.msra.mxu0 %v1243
  %1304 = vmatpush.msra.mxu0 %v1242
  %1305 = vmatpush.msra.mxu0 %v1241
  %1306 = vmatpush.msra.mxu0 %v1240
  %1307 = vmatpush.msra.mxu0 %v1239
  %1308 = vmatpush.msra.mxu0 %v1238
  %1309 = vmatmul.f32.gmra.mxu0 %v1236
  %v1310 = vpop.f32.mrf.mxu0
  %v1311 = vadd.f32 %v1291, %v1310
  %1312 = vdwg.mxu0
  %s1313 = scalar_lea.vmem [#allocation4], 2
  %v1314 = vld [vmem:[%s1313] ss:$4 sm:$0xff]
  %s1315 = scalar_lea.vmem %s2, 1024
  %v1316 = vld [vmem:[%s1315] sm:$0xff]
  %v1317 = vld [vmem:[%s1315 + $0x8] sm:$0xff]
  %v1318 = vld [vmem:[%s1315 + $0x10] sm:$0xff]
  %v1319 = vld [vmem:[%s1315 + $0x18] sm:$0xff]
  %v1320 = vld [vmem:[%s1315 + $0x20] sm:$0xff]
  %v1321 = vld [vmem:[%s1315 + $0x28] sm:$0xff]
  %v1322 = vld [vmem:[%s1315 + $0x30] sm:$0xff]
  %v1323 = vld [vmem:[%s1315 + $0x38] sm:$0xff]
  %v1324 = vld [vmem:[%s1315 + $0x40] sm:$0xff]
  %v1325 = vld [vmem:[%s1315 + $0x48] sm:$0xff]
  %v1326 = vld [vmem:[%s1315 + $0x50] sm:$0xff]
  %v1327 = vld [vmem:[%s1315 + $0x58] sm:$0xff]
  %v1328 = vld [vmem:[%s1315 + $0x60] sm:$0xff]
  %v1329 = vld [vmem:[%s1315 + $0x68] sm:$0xff]
  %v1330 = vld [vmem:[%s1315 + $0x70] sm:$0xff]
  %v1331 = vld [vmem:[%s1315 + $0x78] sm:$0xff]
  %1332 = vmatpush.msra.mxu0 %v1331
  %1333 = vmatpush.msra.mxu0 %v1330
  %1334 = vmatpush.msra.mxu0 %v1329
  %1335 = vmatpush.msra.mxu0 %v1328
  %1336 = vmatpush.msra.mxu0 %v1327
  %1337 = vmatpush.msra.mxu0 %v1326
  %1338 = vmatpush.msra.mxu0 %v1325
  %1339 = vmatpush.msra.mxu0 %v1324
  %1340 = vmatpush.msra.mxu0 %v1323
  %1341 = vmatpush.msra.mxu0 %v1322
  %1342 = vmatpush.msra.mxu0 %v1321
  %1343 = vmatpush.msra.mxu0 %v1320
  %1344 = vmatpush.msra.mxu0 %v1319
  %1345 = vmatpush.msra.mxu0 %v1318
  %1346 = vmatpush.msra.mxu0 %v1317
  %1347 = vmatpush.msra.mxu0 %v1316
  %1348 = vmatmul.f32.gmra.mxu0 %v1314
  %v1349 = vpop.f32.mrf.mxu0
  %v1350 = vadd.f32 0.0, %v1349
  %1351 = vdwg.mxu0
  %v1352 = vadd.f32 %v1311, %v1350
  %v1353 = vld [vmem:[%s5 + $0x4] sm:$0x1]
  %v1354 = vperm.slane %v1353, 0
  %v1355 = vadd.f32 %v1352, %v1354
  %v1356 = vmax.f32 %v1355, 0.0
  %v1357 = vld [vmem:[%s3] sm:$0xff]
  %v1358 = vld [vmem:[%s3 + $0x8] sm:$0xff]
  %v1359 = vld [vmem:[%s3 + $0x10] sm:$0xff]
  %v1360 = vld [vmem:[%s3 + $0x18] sm:$0xff]
  %v1361 = vld [vmem:[%s3 + $0x20] sm:$0xff]
  %v1362 = vld [vmem:[%s3 + $0x28] sm:$0xff]
  %v1363 = vld [vmem:[%s3 + $0x30] sm:$0xff]
  %v1364 = vld [vmem:[%s3 + $0x38] sm:$0xff]
  %v1365 = vld [vmem:[%s3 + $0x40] sm:$0xff]
  %v1366 = vld [vmem:[%s3 + $0x48] sm:$0xff]
  %v1367 = vld [vmem:[%s3 + $0x50] sm:$0xff]
  %v1368 = vld [vmem:[%s3 + $0x58] sm:$0xff]
  %v1369 = vld [vmem:[%s3 + $0x60] sm:$0xff]
  %v1370 = vld [vmem:[%s3 + $0x68] sm:$0xff]
  %v1371 = vld [vmem:[%s3 + $0x70] sm:$0xff]
  %v1372 = vld [vmem:[%s3 + $0x78] sm:$0xff]
  %v1373 = vld [vmem:[%s4] sm:$0x1]
  %v1375 = vperm.slane %v1373, 0
  %1377 = vmatpush.msra.mxu0 %v1372
  %1378 = vmatpush.msra.mxu0 %v1371
  %1379 = vmatpush.msra.mxu0 %v1370
  %1380 = vmatpush.msra.mxu0 %v1369
  %1381 = vmatpush.msra.mxu0 %v1368
  %1382 = vmatpush.msra.mxu0 %v1367
  %1383 = vmatpush.msra.mxu0 %v1366
  %1384 = vmatpush.msra.mxu0 %v1365
  %1385 = vmatpush.msra.mxu0 %v1364
  %1386 = vmatpush.msra.mxu0 %v1363
  %1387 = vmatpush.msra.mxu0 %v1362
  %1388 = vmatpush.msra.mxu0 %v1361
  %1389 = vmatpush.msra.mxu0 %v1360
  %1390 = vmatpush.msra.mxu0 %v1359
  %1391 = vmatpush.msra.mxu0 %v1358
  %1392 = vmatpush.msra.mxu0 %v1357
  %1393 = vmatmul.f32.gmra.mxu0 %v1356
  %v1394 = vpop.f32.mrf.mxu0
  %v1395 = vadd.f32 %v1375, %v1394
  %1396 = vdwg.mxu0
  %1397 = vst [vmem:[%s6] sm:$0xff] %v1395
  // Predicated region
  $region26: #{encoder_forward.1} parent=0 // pred_check
    _
  $region27: #{encoder_forward.1} parent=0 // pred_check_branch
    %1399 = sbr.rel (0) target = $region29
  $region28: #{encoder_forward.1} parent=0 // pred_region
    _
  $region29: #{encoder_forward.1} parent=0 // pred_fallthru
    _
  // Predicated region
  $region30: #{encoder_forward.1} parent=0 // pred_check
    _
  $region31: #{encoder_forward.1} parent=0 // pred_check_branch
    %1401 = sbr.rel (0) target = $region33
  $region32: #{encoder_forward.1} parent=0 // pred_region
    _
  $region33: #{encoder_forward.1} parent=0 // pred_fallthru
    _

</llo_original>
